<compile_context>
chip_gen: v7x
topology: tpu7x:2x2x1
jax: 0.10.0
libtpu: 0.0.40
codegen_flags: <defaults>
</compile_context>

<pallas_src>
import numpy as np
import jax
import jax.numpy as jnp
from jax.experimental import pallas as pl
from jax.experimental.pallas import tpu as pltpu

_DILATIONS = (1, 3, 5, 7)
_PAD = 8  # zero rows appended to the length axis before the dilated-branch stage


def _mroll(a, shift, rows):
    """Non-circular shift along axis 1: out[:, t] = a[:, t - shift], zero-filled.

    Implemented as a circular pltpu.roll (XLU) + one boundary select, instead of
    a concatenate-with-zeros copy.
    """
    n = a.shape[1]
    rolled = pltpu.roll(a, shift=shift % n, axis=1)
    if shift > 0:
        return jnp.where(rows >= shift, rolled, 0.0)
    return jnp.where(rows < n + shift, rolled, 0.0)


def _identity_block3_kernel(
    x_ref,                     # [Bt, Cin, L]        (NCL block)
    w1_ref, b1_ref,            # conv1 taps fused:   [Cin, 4*Cout], [1, Cout]
    w2_ref, b2_ref,            # conv2 taps fused:   [Cout, 3*Cout], [1, Cout]
    wb_ref, bb_ref,            # dilated branches:   [Cout, 3*Cout], [1, Cout]
    wf1_ref, bf1_ref,          # SE fc1:             [Cout, Cr], [1, Cr]
    wf2_ref, bf2_ref,          # SE fc2:             [Cr, Cout], [1, Cout]
    w3_ref, b3_ref,            # 1x1 conv:           [Cout, Cout], [1, Cout]
    out_ref,                   # [Bt, Cout, 2L]      (NCL block)
):
    f32, bf16 = jnp.float32, jnp.bfloat16
    Bt, Cin, L = x_ref.shape
    Cout = out_ref.shape[1]
    L2 = out_ref.shape[2]
    L2p = L2 + _PAD
    Cq = Cout // 4
    b1, b2, bb = b1_ref[0], b2_ref[0], bb_ref[0]

    # NCL -> NLC: one fused minor-dim transpose (no per-sample unrolled loop).
    x = jnp.transpose(x_ref[...], (0, 2, 1)).astype(bf16)            # [Bt, L, Cin]

    # Row iotas (hoisted; reused by all boundary masks of the same length).
    rows_L = jax.lax.broadcasted_iota(jnp.int32, (Bt, L, Cout), 1)
    rows_L2 = jax.lax.broadcasted_iota(jnp.int32, (Bt, L2, Cout), 1)

    # ---- conv1: ConvTranspose1d(k=4, s=2, p=1), polyphase decomposition ----
    #   y[2m]   = x[m] @ W1 + x[m-1] @ W3 + b1
    #   y[2m+1] = x[m] @ W2 + x[m+1] @ W0 + b1
    xw = jnp.dot(x.reshape(Bt * L, Cin), w1_ref[...],
                 preferred_element_type=f32).reshape(Bt, L, 4 * Cout)
    even = xw[:, :, Cout:2 * Cout] + _mroll(xw[:, :, 3 * Cout:], 1, rows_L) + b1
    odd = xw[:, :, 2 * Cout:3 * Cout] + _mroll(xw[:, :, :Cout], -1, rows_L) + b1
    # interleave phases: [Bt, L, 2, Cout] -> [Bt, 2L, Cout] (sublane relayout only)
    y = jnp.stack((even, odd), axis=2).reshape(Bt, L2, Cout)
    x1 = y                                                           # residual (f32)

    # ---- conv2 (ConvTranspose1d k=3, s=1, p=1) + ReLU ----
    yw = jnp.dot(y.astype(bf16).reshape(Bt * L2, Cout), w2_ref[...],
                 preferred_element_type=f32).reshape(Bt, L2, 3 * Cout)
    z = (yw[:, :, Cout:2 * Cout]
         + _mroll(yw[:, :, :Cout], -1, rows_L2)
         + _mroll(yw[:, :, 2 * Cout:], 1, rows_L2)
         + b2)
    z = jnp.maximum(z, 0.0)

    # ---- four dilated ConvTranspose1d branches (d = 1,3,5,7), fused ----
    # Pad z with _PAD zero rows: all 8 shifted taps then become plain circular
    # rolls (wrapped rows land in the zero pad), no boundary masks needed.
    z_pad = jnp.concatenate(
        [z.astype(bf16), jnp.zeros((Bt, _PAD, Cout), bf16)], axis=1)  # [Bt, L2p, C]
    zw = jnp.dot(z_pad.reshape(Bt * L2p, Cout), wb_ref[...],
                 preferred_element_type=f32).reshape(Bt, L2p, 3 * Cout)
    tap0 = zw[:, :, :Cout]
    tap1 = zw[:, :, Cout:2 * Cout]          # already in final (branch-major) order
    tap2 = zw[:, :, 2 * Cout:]
    # per-dilation shifted contributions (full width; XLU rolls, no masks)
    terms = [pltpu.roll(tap0, shift=(L2p - d) % L2p, axis=1)          # tap 0: t+d
             + pltpu.roll(tap2, shift=d, axis=1)                      # tap 2: t-d
             for d in _DILATIONS]
    # pick the right dilation per output-channel group with a 3-deep lane select
    lane = jax.lax.broadcasted_iota(jnp.int32, (Bt, L2p, Cout), 2)
    sel = jnp.where(lane < Cq, terms[0],
                    jnp.where(lane < 2 * Cq, terms[1],
                              jnp.where(lane < 3 * Cq, terms[2], terms[3])))
    output = (tap1 + sel + bb)[:, :L2, :]                             # drop pad rows

    # ---- SE: mean over length -> fc1 -> ReLU -> fc2 -> sigmoid ----
    pooled = jnp.mean(output, axis=1)                                 # [Bt, Cout]
    h = jnp.maximum(jnp.dot(pooled, wf1_ref[...],
                            preferred_element_type=f32) + bf1_ref[0], 0.0)
    g = jnp.dot(h, wf2_ref[...], preferred_element_type=f32) + bf2_ref[0]
    gate = jax.nn.sigmoid(g)[:, None, :]                              # [Bt, 1, Cout]

    # ---- gate * output + residual, ReLU, 1x1 conv ----
    w_out = jnp.maximum(gate * output + x1, 0.0)
    res = (jnp.dot(w_out.astype(bf16).reshape(Bt * L2, Cout), w3_ref[...],
                   preferred_element_type=f32)
           + b3_ref[0]).reshape(Bt, L2, Cout)

    # NLC -> NCL writeback: single fused transpose, lane dim = L2 (lane-dense).
    out_ref[...] = jnp.transpose(res, (0, 2, 1)).astype(out_ref.dtype)


# --------------------------- parameters & wrapper ---------------------------
def init_params(key, Cin, Cout, ra, weight_dtype=jnp.bfloat16):
    assert Cout % 4 == 0 and Cout % ra == 0
    Cq = Cout // 4
    Cr = Cout // ra
    keys = jax.random.split(key, 12)
    s = 0.1
    w1 = jax.random.normal(keys[0], (4, Cin, Cout), jnp.float32) * s     # ConvT k=4
    w2 = jax.random.normal(keys[1], (3, Cout, Cout), jnp.float32) * s    # ConvT k=3
    wb = jax.random.normal(keys[2], (4, 3, Cout, Cq), jnp.float32) * s   # 4 dilated
    params = dict(
        # taps fused along output columns (wide MXU matmuls in the kernel)
        w1cat=jnp.concatenate([w1[j] for j in range(4)], axis=1).astype(weight_dtype),
        b1=jax.random.normal(keys[3], (1, Cout), jnp.float32) * s,
        w2cat=jnp.concatenate([w2[j] for j in range(3)], axis=1).astype(weight_dtype),
        b2=jax.random.normal(keys[4], (1, Cout), jnp.float32) * s,
        # columns ordered (tap j, branch br)
        wbcat=jnp.concatenate([wb[br, j] for j in range(3) for br in range(4)],
                              axis=1).astype(weight_dtype),
        bb=jax.random.normal(keys[5], (1, Cout), jnp.float32) * s,
        wf1=jax.random.normal(keys[6], (Cout, Cr), jnp.float32) * s,   # Linear W.T
        bf1=jax.random.normal(keys[7], (1, Cr), jnp.float32) * s,
        wf2=jax.random.normal(keys[8], (Cr, Cout), jnp.float32) * s,   # Linear W.T
        bf2=jax.random.normal(keys[9], (1, Cout), jnp.float32) * s,
        w3=(jax.random.normal(keys[10], (Cout, Cout), jnp.float32) * s
            ).astype(weight_dtype),                                     # Conv1d k=1 W.T
        b3=jax.random.normal(keys[11], (1, Cout), jnp.float32) * s,
    )
    return params


def _vmem_limit_bytes():
    """Scoped-VMEM limit: 3/4 of physical per-core VMEM, capped at 100 MiB."""
    try:
        phys = int(pltpu.get_tpu_info().vmem_capacity_bytes)
    except Exception:
        phys = 64 * 1024 * 1024          # conservative default (v7x per-TC VMEM)
    return min(int(phys * 0.75), 100 * 1024 * 1024)


def _kernel_vmem_bytes(bt, Cin, Cout, L):
    """Rough per-grid-step VMEM footprint of the kernel body (f32/bf16 buffers)."""
    L2, L2p = 2 * L, 2 * L + _PAD
    act = 0
    act += L * Cin * 6                       # x (f32 view + bf16 copy)
    act += L * 4 * Cout * 4                  # xw
    act += 2 * L * Cout * 4                  # even / odd
    act += L2 * Cout * 6                     # y (=x1) f32 + bf16 copy
    act += L2 * 3 * Cout * 4                 # yw
    act += L2 * Cout * 4 + L2p * Cout * 2    # z + z_pad (bf16)
    act += L2p * 3 * Cout * 4                # zw
    act += 5 * L2p * Cout * 4                # branch terms + select + output
    act += L2 * Cout * 10                    # w_out f32 + bf16, res
    act += (L + L2 + L2p) * Cout * 4         # iota / mask helpers
    io = 2 * (L * Cin * 4 + L2 * Cout * 4)   # double-buffered NCL in / out blocks
    return bt * (act + io)


def _weights_vmem_bytes(weights):
    return 2 * sum(int(np.prod(w.shape)) * w.dtype.itemsize for w in weights)


def _pick_block_batch(B, Cin, Cout, L, budget_bytes, weights):
    """Largest Bt dividing B that fits the VMEM budget, keeping >=2 grid steps
    (so both v7x TensorCores get work) whenever B >= 2."""
    budget = budget_bytes - _weights_vmem_bytes(weights)
    best = 1
    for bt in range(1, B + 1):
        if B % bt:
            continue
        steps_ok = (B // bt >= 2) or (B == 1)
        if steps_ok and _kernel_vmem_bytes(bt, Cin, Cout, L) <= budget:
            best = bt
    # TODO(synk): if even bt=1 exceeds the budget (very long L on v7x), add an
    # L-tile grid axis with a 7-row halo instead of relying on spills.
    return best


def identity_block3_forward(x_ncl, params, block_batch=None):
    B, Cin, L = x_ncl.shape
    Cout = params["b1"].shape[1]
    Cr = params["wf1"].shape[1]
    L2 = 2 * L
    L2p = L2 + _PAD

    weights = (
        params["w1cat"], params["b1"], params["w2cat"], params["b2"],
        params["wbcat"], params["bb"], params["wf1"], params["bf1"],
        params["wf2"], params["bf2"], params["w3"], params["b3"],
    )

    vmem_limit = _vmem_limit_bytes()
    if block_batch is None:
        block_batch = _pick_block_batch(B, Cin, Cout, L,
                                        int(0.75 * vmem_limit), weights)
    Bt = block_batch
    assert B % Bt == 0

    def weight_spec(a):
        nd = a.ndim
        return pl.BlockSpec(a.shape, lambda b, _nd=nd: (0,) * _nd)

    in_specs = [pl.BlockSpec((Bt, Cin, L), lambda b: (b, 0, 0))]
    in_specs += [weight_spec(a) for a in weights]
    out_spec = pl.BlockSpec((Bt, Cout, L2), lambda b: (b, 0, 0))

    # Advisory cost estimate so XLA schedules surrounding ops sensibly.
    matmul_flops = 2 * B * (L * Cin * 4 * Cout        # conv1
                            + L2 * Cout * 3 * Cout    # conv2
                            + L2p * Cout * 3 * Cout   # dilated branches
                            + L2 * Cout * Cout        # 1x1 conv
                            + Cout * Cr + Cr * Cout)  # SE
    elem_flops = B * L2 * Cout * 40
    bytes_accessed = (x_ncl.size * x_ncl.dtype.itemsize
                      + B * Cout * L2 * 4
                      + sum(int(np.prod(w.shape)) * w.dtype.itemsize
                            for w in weights))
    cost = pl.CostEstimate(flops=int(matmul_flops + elem_flops),
                           transcendentals=int(B * Cout),
                           bytes_accessed=int(bytes_accessed))

    return pl.pallas_call(
        _identity_block3_kernel,
        out_shape=jax.ShapeDtypeStruct((B, Cout, L2), jnp.float32),
        grid_spec=pltpu.PrefetchScalarGridSpec(
            num_scalar_prefetch=0,
            grid=(B // Bt,),
            in_specs=in_specs,
            out_specs=out_spec,
        ),
        compiler_params=pltpu.CompilerParams(
            dimension_semantics=("parallel",),
            vmem_limit_bytes=int(vmem_limit),
        ),
        cost_estimate=cost,
    )(x_ncl, *weights)


# ----------------------- pure-NumPy reference (PyTorch rule) -----------------------
def _conv_transpose1d_np(x_lc, taps, bias, stride, padding, dilation):
    # x_lc: [L, Cin]; taps: [k, Cin, Cout]; t = i*stride + j*dilation - padding
    k, _, cout = taps.shape
    L = x_lc.shape[0]
    L_out = (L - 1) * stride - 2 * padding + dilation * (k - 1) + 1
    out = np.zeros((L_out, cout), np.float32)
    for j in range(k):
        contrib = x_lc @ taps[j]
        for i in range(L):
            t = i * stride + j * dilation - padding
            if 0 <= t < L_out:
                out[t] += contrib[i]
    return out + bias


def identity_block3_reference(x_ncl, params):
    x_ncl = np.asarray(x_ncl, np.float32)
    B = x_ncl.shape[0]
    w1cat = np.asarray(params["w1cat"], np.float32)
    w2cat = np.asarray(params["w2cat"], np.float32)
    wbcat = np.asarray(params["wbcat"], np.float32)
    Cout = w1cat.shape[1] // 4
    Cq = Cout // 4
    w1 = np.stack([w1cat[:, j * Cout:(j + 1) * Cout] for j in range(4)])
    w2 = np.stack([w2cat[:, j * Cout:(j + 1) * Cout] for j in range(3)])
    wb = [np.stack([wbcat[:, j * Cout + br * Cq: j * Cout + (br + 1) * Cq]
                    for j in range(3)]) for br in range(4)]
    b1 = np.asarray(params["b1"], np.float32)[0]
    b2 = np.asarray(params["b2"], np.float32)[0]
    bb = np.asarray(params["bb"], np.float32)[0]
    wf1 = np.asarray(params["wf1"], np.float32)
    bf1 = np.asarray(params["bf1"], np.float32)[0]
    wf2 = np.asarray(params["wf2"], np.float32)
    bf2 = np.asarray(params["bf2"], np.float32)[0]
    w3 = np.asarray(params["w3"], np.float32)
    b3 = np.asarray(params["b3"], np.float32)[0]

    outs = []
    for b in range(B):
        x = x_ncl[b].T                                               # [L, Cin]
        y = _conv_transpose1d_np(x, w1, b1, 2, 1, 1)                 # [2L, Cout]
        x1 = y
        z = np.maximum(_conv_transpose1d_np(y, w2, b2, 1, 1, 1), 0.0)
        branches = [_conv_transpose1d_np(z, wb[br], bb[br * Cq:(br + 1) * Cq], 1, d, d)
                    for br, d in enumerate(_DILATIONS)]
        output = np.concatenate(branches, axis=1)
        pooled = output.mean(axis=0)
        h = np.maximum(pooled @ wf1 + bf1, 0.0)
        gate = 1.0 / (1.0 + np.exp(-(h @ wf2 + bf2)))
        w_out = np.maximum(gate * output + x1, 0.0)
        outs.append((w_out @ w3 + b3).T)                             # [Cout, 2L]
    return np.stack(outs, axis=0)


if __name__ == "__main__":
    B, Cin, Cout, ra, L = 2, 8, 16, 4, 8
    key = jax.random.PRNGKey(0)
    kx, kp = jax.random.split(key)
    x = jax.random.normal(kx, (B, Cin, L), jnp.float32)
    params = init_params(kp, Cin, Cout, ra)

    out = identity_block3_forward(x, params)
    out = jax.block_until_ready(out)

    assert out.shape == (B, Cout, 2 * L), out.shape
    assert bool(jnp.all(jnp.isfinite(out)))

    ref = identity_block3_reference(np.asarray(x), params)
    np.testing.assert_allclose(np.asarray(out), ref, rtol=5e-2, atol=5e-2)
    print("KERNEL_OK")
</pallas_src>

<mosaic_0001>
module attributes {stable_mosaic.version = 11 : i64} {
  func.func @_identity_block3_kernel(%arg0: i32, %arg1: memref<1x8x8xf32, #tpu.memory_space<vmem>>, %arg2: memref<8x64xbf16, #tpu.memory_space<vmem>>, %arg3: memref<1x16xf32, #tpu.memory_space<vmem>>, %arg4: memref<16x48xbf16, #tpu.memory_space<vmem>>, %arg5: memref<1x16xf32, #tpu.memory_space<vmem>>, %arg6: memref<16x48xbf16, #tpu.memory_space<vmem>>, %arg7: memref<1x16xf32, #tpu.memory_space<vmem>>, %arg8: memref<16x4xf32, #tpu.memory_space<vmem>>, %arg9: memref<1x4xf32, #tpu.memory_space<vmem>>, %arg10: memref<4x16xf32, #tpu.memory_space<vmem>>, %arg11: memref<1x16xf32, #tpu.memory_space<vmem>>, %arg12: memref<16x16xbf16, #tpu.memory_space<vmem>>, %arg13: memref<1x16xf32, #tpu.memory_space<vmem>>, %arg14: memref<1x16x16xf32, #tpu.memory_space<vmem>>) attributes {dimension_semantics = [#tpu.dimension_semantics<parallel>], iteration_bounds = array<i64: 2>, scalar_prefetch = 0 : i64, scratch_operands = 0 : i64, tpu.core_type = #tpu.core_type<tc>, window_params = [{transform_indices = @transform_0, window_bounds = array<i64: 1, 8, 8>}, {pipeline_mode = #tpu.pipeline_mode<synchronous>, transform_indices = @transform_1, window_bounds = array<i64: 8, 64>}, {pipeline_mode = #tpu.pipeline_mode<synchronous>, transform_indices = @transform_2, window_bounds = array<i64: 1, 16>}, {pipeline_mode = #tpu.pipeline_mode<synchronous>, transform_indices = @transform_3, window_bounds = array<i64: 16, 48>}, {pipeline_mode = #tpu.pipeline_mode<synchronous>, transform_indices = @transform_4, window_bounds = array<i64: 1, 16>}, {pipeline_mode = #tpu.pipeline_mode<synchronous>, transform_indices = @transform_5, window_bounds = array<i64: 16, 48>}, {pipeline_mode = #tpu.pipeline_mode<synchronous>, transform_indices = @transform_6, window_bounds = array<i64: 1, 16>}, {pipeline_mode = #tpu.pipeline_mode<synchronous>, transform_indices = @transform_7, window_bounds = array<i64: 16, 4>}, {pipeline_mode = #tpu.pipeline_mode<synchronous>, transform_indices = @transform_8, window_bounds = array<i64: 1, 4>}, {pipeline_mode = #tpu.pipeline_mode<synchronous>, transform_indices = @transform_9, window_bounds = array<i64: 4, 16>}, {pipeline_mode = #tpu.pipeline_mode<synchronous>, transform_indices = @transform_10, window_bounds = array<i64: 1, 16>}, {pipeline_mode = #tpu.pipeline_mode<synchronous>, transform_indices = @transform_11, window_bounds = array<i64: 16, 16>}, {pipeline_mode = #tpu.pipeline_mode<synchronous>, transform_indices = @transform_12, window_bounds = array<i64: 1, 16>}, {transform_indices = @transform_13, window_bounds = array<i64: 1, 16, 16>}]} {
    %c0 = arith.constant 0 : index
    %c0_0 = arith.constant 0 : index
    %0 = vector.load %arg3[%c0, %c0_0] : memref<1x16xf32, #tpu.memory_space<vmem>>, vector<1x16xf32>
    %1 = vector.shape_cast %0 : vector<1x16xf32> to vector<16xf32>
    %c0_1 = arith.constant 0 : index
    %c0_2 = arith.constant 0 : index
    %2 = vector.load %arg5[%c0_1, %c0_2] : memref<1x16xf32, #tpu.memory_space<vmem>>, vector<1x16xf32>
    %3 = vector.shape_cast %2 : vector<1x16xf32> to vector<16xf32>
    %c0_3 = arith.constant 0 : index
    %c0_4 = arith.constant 0 : index
    %4 = vector.load %arg7[%c0_3, %c0_4] : memref<1x16xf32, #tpu.memory_space<vmem>>, vector<1x16xf32>
    %5 = vector.shape_cast %4 : vector<1x16xf32> to vector<16xf32>
    %c0_5 = arith.constant 0 : index
    %c0_6 = arith.constant 0 : index
    %c0_7 = arith.constant 0 : index
    %6 = vector.load %arg1[%c0_5, %c0_6, %c0_7] : memref<1x8x8xf32, #tpu.memory_space<vmem>>, vector<1x8x8xf32>
    %7 = tpu.transpose %6, [0, 2, 1] : vector<1x8x8xf32> -> vector<1x8x8xf32>
    %8 = arith.truncf %7 : vector<1x8x8xf32> to vector<1x8x8xbf16>
    %9 = tpu.iota {dimensions = array<i32: 1>} : vector<1x8x16xi32>
    %10 = tpu.iota {dimensions = array<i32: 1>} : vector<1x16x16xi32>
    %11 = vector.shape_cast %8 : vector<1x8x8xbf16> to vector<8x8xbf16>
    %c0_8 = arith.constant 0 : index
    %c0_9 = arith.constant 0 : index
    %12 = vector.load %arg2[%c0_8, %c0_9] : memref<8x64xbf16, #tpu.memory_space<vmem>>, vector<8x64xbf16>
    %cst = arith.constant dense<0.000000e+00> : vector<8x64xf32>
    %13 = tpu.matmul %11, %12, %cst {dimension_numbers = #tpu.dot_dimension_numbers<[1], [0], [0], [1], [0, 0, 1, 1], [], []>} : vector<8x8xbf16>, vector<8x64xbf16>, vector<8x64xf32> -> vector<8x64xf32>
    %14 = vector.shape_cast %13 : vector<8x64xf32> to vector<1x8x64xf32>
    %15 = vector.extract_strided_slice %14 {offsets = [0, 0, 16], sizes = [1, 8, 16], strides = [1, 1, 1]} : vector<1x8x64xf32> to vector<1x8x16xf32>
    %16 = vector.extract_strided_slice %14 {offsets = [0, 0, 48], sizes = [1, 8, 16], strides = [1, 1, 1]} : vector<1x8x64xf32> to vector<1x8x16xf32>
    %c1_i32 = arith.constant 1 : i32
    %17 = tpu.dynamic_rotate %16 by %c1_i32 dim 1 : vector<1x8x16xf32>, i32 -> vector<1x8x16xf32>
    %c1_i32_10 = arith.constant 1 : i32
    %18 = vector.broadcast %c1_i32_10 : i32 to vector<1x8x16xi32>
    %19 = arith.cmpi sge, %9, %18 : vector<1x8x16xi32>
    %cst_11 = arith.constant 0.000000e+00 : f32
    %20 = vector.broadcast %cst_11 : f32 to vector<1x8x16xf32>
    %21 = arith.select %19, %17, %20 : vector<1x8x16xi1>, vector<1x8x16xf32>
    %22 = arith.addf %15, %21 : vector<1x8x16xf32>
    %23 = vector.shape_cast %1 : vector<16xf32> to vector<1x1x16xf32>
    %24 = vector.broadcast %23 : vector<1x1x16xf32> to vector<1x8x16xf32>
    %25 = arith.addf %22, %24 : vector<1x8x16xf32>
    %26 = vector.extract_strided_slice %14 {offsets = [0, 0, 32], sizes = [1, 8, 16], strides = [1, 1, 1]} : vector<1x8x64xf32> to vector<1x8x16xf32>
    %27 = vector.extract_strided_slice %14 {offsets = [0, 0, 0], sizes = [1, 8, 16], strides = [1, 1, 1]} : vector<1x8x64xf32> to vector<1x8x16xf32>
    %c7_i32 = arith.constant 7 : i32
    %28 = tpu.dynamic_rotate %27 by %c7_i32 dim 1 : vector<1x8x16xf32>, i32 -> vector<1x8x16xf32>
    %c7_i32_12 = arith.constant 7 : i32
    %29 = vector.broadcast %c7_i32_12 : i32 to vector<1x8x16xi32>
    %30 = arith.cmpi slt, %9, %29 : vector<1x8x16xi32>
    %cst_13 = arith.constant 0.000000e+00 : f32
    %31 = vector.broadcast %cst_13 : f32 to vector<1x8x16xf32>
    %32 = arith.select %30, %28, %31 : vector<1x8x16xi1>, vector<1x8x16xf32>
    %33 = arith.addf %26, %32 : vector<1x8x16xf32>
    %34 = vector.shape_cast %1 : vector<16xf32> to vector<1x1x16xf32>
    %35 = vector.broadcast %34 : vector<1x1x16xf32> to vector<1x8x16xf32>
    %36 = arith.addf %33, %35 : vector<1x8x16xf32>
    %37 = vector.shape_cast %25 : vector<1x8x16xf32> to vector<1x8x1x16xf32>
    %38 = vector.shape_cast %36 : vector<1x8x16xf32> to vector<1x8x1x16xf32>
    %39 = tpu.concatenate %37, %38 in 2 : vector<1x8x1x16xf32>, vector<1x8x1x16xf32> -> vector<1x8x2x16xf32>
    %40 = vector.shape_cast %39 : vector<1x8x2x16xf32> to vector<1x16x16xf32>
    %41 = arith.truncf %40 : vector<1x16x16xf32> to vector<1x16x16xbf16>
    %42 = vector.shape_cast %41 : vector<1x16x16xbf16> to vector<16x16xbf16>
    %c0_14 = arith.constant 0 : index
    %c0_15 = arith.constant 0 : index
    %43 = vector.load %arg4[%c0_14, %c0_15] : memref<16x48xbf16, #tpu.memory_space<vmem>>, vector<16x48xbf16>
    %cst_16 = arith.constant dense<0.000000e+00> : vector<16x48xf32>
    %44 = tpu.matmul %42, %43, %cst_16 {dimension_numbers = #tpu.dot_dimension_numbers<[1], [0], [0], [1], [0, 0, 1, 1], [], []>} : vector<16x16xbf16>, vector<16x48xbf16>, vector<16x48xf32> -> vector<16x48xf32>
    %45 = vector.shape_cast %44 : vector<16x48xf32> to vector<1x16x48xf32>
    %46 = vector.extract_strided_slice %45 {offsets = [0, 0, 16], sizes = [1, 16, 16], strides = [1, 1, 1]} : vector<1x16x48xf32> to vector<1x16x16xf32>
    %47 = vector.extract_strided_slice %45 {offsets = [0, 0, 0], sizes = [1, 16, 16], strides = [1, 1, 1]} : vector<1x16x48xf32> to vector<1x16x16xf32>
    %c15_i32 = arith.constant 15 : i32
    %48 = tpu.dynamic_rotate %47 by %c15_i32 dim 1 : vector<1x16x16xf32>, i32 -> vector<1x16x16xf32>
    %c15_i32_17 = arith.constant 15 : i32
    %49 = vector.broadcast %c15_i32_17 : i32 to vector<1x16x16xi32>
    %50 = arith.cmpi slt, %10, %49 : vector<1x16x16xi32>
    %cst_18 = arith.constant 0.000000e+00 : f32
    %51 = vector.broadcast %cst_18 : f32 to vector<1x16x16xf32>
    %52 = arith.select %50, %48, %51 : vector<1x16x16xi1>, vector<1x16x16xf32>
    %53 = arith.addf %46, %52 : vector<1x16x16xf32>
    %54 = vector.extract_strided_slice %45 {offsets = [0, 0, 32], sizes = [1, 16, 16], strides = [1, 1, 1]} : vector<1x16x48xf32> to vector<1x16x16xf32>
    %c1_i32_19 = arith.constant 1 : i32
    %55 = tpu.dynamic_rotate %54 by %c1_i32_19 dim 1 : vector<1x16x16xf32>, i32 -> vector<1x16x16xf32>
    %c1_i32_20 = arith.constant 1 : i32
    %56 = vector.broadcast %c1_i32_20 : i32 to vector<1x16x16xi32>
    %57 = arith.cmpi sge, %10, %56 : vector<1x16x16xi32>
    %cst_21 = arith.constant 0.000000e+00 : f32
    %58 = vector.broadcast %cst_21 : f32 to vector<1x16x16xf32>
    %59 = arith.select %57, %55, %58 : vector<1x16x16xi1>, vector<1x16x16xf32>
    %60 = arith.addf %53, %59 : vector<1x16x16xf32>
    %61 = vector.shape_cast %3 : vector<16xf32> to vector<1x1x16xf32>
    %62 = vector.broadcast %61 : vector<1x1x16xf32> to vector<1x16x16xf32>
    %63 = arith.addf %60, %62 : vector<1x16x16xf32>
    %cst_22 = arith.constant 0.000000e+00 : f32
    %64 = vector.broadcast %cst_22 : f32 to vector<1x16x16xf32>
    %65 = arith.maximumf %63, %64 : vector<1x16x16xf32>
    %66 = arith.truncf %65 : vector<1x16x16xf32> to vector<1x16x16xbf16>
    %cst_23 = arith.constant 0.000000e+00 : bf16
    %67 = vector.broadcast %cst_23 : bf16 to vector<1x8x16xbf16>
    %68 = tpu.concatenate %66, %67 in 1 : vector<1x16x16xbf16>, vector<1x8x16xbf16> -> vector<1x24x16xbf16>
    %69 = vector.shape_cast %68 : vector<1x24x16xbf16> to vector<24x16xbf16>
    %c0_24 = arith.constant 0 : index
    %c0_25 = arith.constant 0 : index
    %70 = vector.load %arg6[%c0_24, %c0_25] : memref<16x48xbf16, #tpu.memory_space<vmem>>, vector<16x48xbf16>
    %cst_26 = arith.constant dense<0.000000e+00> : vector<24x48xf32>
    %71 = tpu.matmul %69, %70, %cst_26 {dimension_numbers = #tpu.dot_dimension_numbers<[1], [0], [0], [1], [0, 0, 1, 1], [], []>} : vector<24x16xbf16>, vector<16x48xbf16>, vector<24x48xf32> -> vector<24x48xf32>
    %72 = vector.shape_cast %71 : vector<24x48xf32> to vector<1x24x48xf32>
    %73 = vector.extract_strided_slice %72 {offsets = [0, 0, 0], sizes = [1, 24, 16], strides = [1, 1, 1]} : vector<1x24x48xf32> to vector<1x24x16xf32>
    %74 = vector.extract_strided_slice %72 {offsets = [0, 0, 16], sizes = [1, 24, 16], strides = [1, 1, 1]} : vector<1x24x48xf32> to vector<1x24x16xf32>
    %75 = vector.extract_strided_slice %72 {offsets = [0, 0, 32], sizes = [1, 24, 16], strides = [1, 1, 1]} : vector<1x24x48xf32> to vector<1x24x16xf32>
    %c23_i32 = arith.constant 23 : i32
    %76 = tpu.dynamic_rotate %73 by %c23_i32 dim 1 : vector<1x24x16xf32>, i32 -> vector<1x24x16xf32>
    %c1_i32_27 = arith.constant 1 : i32
    %77 = tpu.dynamic_rotate %75 by %c1_i32_27 dim 1 : vector<1x24x16xf32>, i32 -> vector<1x24x16xf32>
    %78 = arith.addf %76, %77 : vector<1x24x16xf32>
    %c21_i32 = arith.constant 21 : i32
    %79 = tpu.dynamic_rotate %73 by %c21_i32 dim 1 : vector<1x24x16xf32>, i32 -> vector<1x24x16xf32>
    %c3_i32 = arith.constant 3 : i32
    %80 = tpu.dynamic_rotate %75 by %c3_i32 dim 1 : vector<1x24x16xf32>, i32 -> vector<1x24x16xf32>
    %81 = arith.addf %79, %80 : vector<1x24x16xf32>
    %c19_i32 = arith.constant 19 : i32
    %82 = tpu.dynamic_rotate %73 by %c19_i32 dim 1 : vector<1x24x16xf32>, i32 -> vector<1x24x16xf32>
    %c5_i32 = arith.constant 5 : i32
    %83 = tpu.dynamic_rotate %75 by %c5_i32 dim 1 : vector<1x24x16xf32>, i32 -> vector<1x24x16xf32>
    %84 = arith.addf %82, %83 : vector<1x24x16xf32>
    %c17_i32 = arith.constant 17 : i32
    %85 = tpu.dynamic_rotate %73 by %c17_i32 dim 1 : vector<1x24x16xf32>, i32 -> vector<1x24x16xf32>
    %c7_i32_28 = arith.constant 7 : i32
    %86 = tpu.dynamic_rotate %75 by %c7_i32_28 dim 1 : vector<1x24x16xf32>, i32 -> vector<1x24x16xf32>
    %87 = arith.addf %85, %86 : vector<1x24x16xf32>
    %88 = tpu.iota {dimensions = array<i32: 2>} : vector<1x24x16xi32>
    %c4_i32 = arith.constant 4 : i32
    %89 = vector.broadcast %c4_i32 : i32 to vector<1x24x16xi32>
    %90 = arith.cmpi slt, %88, %89 : vector<1x24x16xi32>
    %c8_i32 = arith.constant 8 : i32
    %91 = vector.broadcast %c8_i32 : i32 to vector<1x24x16xi32>
    %92 = arith.cmpi slt, %88, %91 : vector<1x24x16xi32>
    %c12_i32 = arith.constant 12 : i32
    %93 = vector.broadcast %c12_i32 : i32 to vector<1x24x16xi32>
    %94 = arith.cmpi slt, %88, %93 : vector<1x24x16xi32>
    %95 = arith.select %94, %84, %87 : vector<1x24x16xi1>, vector<1x24x16xf32>
    %96 = arith.select %92, %81, %95 : vector<1x24x16xi1>, vector<1x24x16xf32>
    %97 = arith.select %90, %78, %96 : vector<1x24x16xi1>, vector<1x24x16xf32>
    %98 = arith.addf %74, %97 : vector<1x24x16xf32>
    %99 = vector.shape_cast %5 : vector<16xf32> to vector<1x1x16xf32>
    %100 = vector.broadcast %99 : vector<1x1x16xf32> to vector<1x24x16xf32>
    %101 = arith.addf %98, %100 : vector<1x24x16xf32>
    %102 = vector.extract_strided_slice %101 {offsets = [0, 0, 0], sizes = [1, 16, 16], strides = [1, 1, 1]} : vector<1x24x16xf32> to vector<1x16x16xf32>
    %cst_29 = arith.constant dense<0.000000e+00> : vector<1x16xf32>
    %103 = vector.multi_reduction <add>, %102, %cst_29 [1] : vector<1x16x16xf32> to vector<1x16xf32>
    %cst_30 = arith.constant 1.600000e+01 : f32
    %104 = vector.broadcast %cst_30 : f32 to vector<1x16xf32>
    %105 = arith.divf %103, %104 : vector<1x16xf32>
    %c0_31 = arith.constant 0 : index
    %c0_32 = arith.constant 0 : index
    %106 = vector.load %arg8[%c0_31, %c0_32] : memref<16x4xf32, #tpu.memory_space<vmem>>, vector<16x4xf32>
    %cst_33 = arith.constant dense<0.000000e+00> : vector<1x4xf32>
    %107 = tpu.matmul %105, %106, %cst_33 {dimension_numbers = #tpu.dot_dimension_numbers<[1], [0], [0], [1], [0, 0, 1, 1], [], []>} : vector<1x16xf32>, vector<16x4xf32>, vector<1x4xf32> -> vector<1x4xf32>
    %c0_34 = arith.constant 0 : index
    %c0_35 = arith.constant 0 : index
    %108 = vector.load %arg9[%c0_34, %c0_35] : memref<1x4xf32, #tpu.memory_space<vmem>>, vector<1x4xf32>
    %109 = vector.shape_cast %108 : vector<1x4xf32> to vector<4xf32>
    %110 = vector.shape_cast %109 : vector<4xf32> to vector<1x4xf32>
    %111 = arith.addf %107, %110 : vector<1x4xf32>
    %cst_36 = arith.constant 0.000000e+00 : f32
    %112 = vector.broadcast %cst_36 : f32 to vector<1x4xf32>
    %113 = arith.maximumf %111, %112 : vector<1x4xf32>
    %c0_37 = arith.constant 0 : index
    %c0_38 = arith.constant 0 : index
    %114 = vector.load %arg10[%c0_37, %c0_38] : memref<4x16xf32, #tpu.memory_space<vmem>>, vector<4x16xf32>
    %cst_39 = arith.constant dense<0.000000e+00> : vector<1x16xf32>
    %115 = tpu.matmul %113, %114, %cst_39 {dimension_numbers = #tpu.dot_dimension_numbers<[1], [0], [0], [1], [0, 0, 1, 1], [], []>} : vector<1x4xf32>, vector<4x16xf32>, vector<1x16xf32> -> vector<1x16xf32>
    %c0_40 = arith.constant 0 : index
    %c0_41 = arith.constant 0 : index
    %116 = vector.load %arg11[%c0_40, %c0_41] : memref<1x16xf32, #tpu.memory_space<vmem>>, vector<1x16xf32>
    %117 = vector.shape_cast %116 : vector<1x16xf32> to vector<16xf32>
    %118 = vector.shape_cast %117 : vector<16xf32> to vector<1x16xf32>
    %119 = arith.addf %115, %118 : vector<1x16xf32>
    %120 = arith.negf %119 : vector<1x16xf32>
    %121 = math.exp %120 : vector<1x16xf32>
    %cst_42 = arith.constant 1.000000e+00 : f32
    %122 = vector.broadcast %cst_42 : f32 to vector<1x16xf32>
    %123 = arith.addf %122, %121 : vector<1x16xf32>
    %124 = arith.divf %122, %123 : vector<1x16xf32>
    %125 = vector.shape_cast %124 : vector<1x16xf32> to vector<1x1x16xf32>
    %126 = vector.broadcast %125 : vector<1x1x16xf32> to vector<1x16x16xf32>
    %127 = arith.mulf %126, %102 : vector<1x16x16xf32>
    %128 = arith.addf %127, %40 : vector<1x16x16xf32>
    %cst_43 = arith.constant 0.000000e+00 : f32
    %129 = vector.broadcast %cst_43 : f32 to vector<1x16x16xf32>
    %130 = arith.maximumf %128, %129 : vector<1x16x16xf32>
    %131 = arith.truncf %130 : vector<1x16x16xf32> to vector<1x16x16xbf16>
    %132 = vector.shape_cast %131 : vector<1x16x16xbf16> to vector<16x16xbf16>
    %c0_44 = arith.constant 0 : index
    %c0_45 = arith.constant 0 : index
    %133 = vector.load %arg12[%c0_44, %c0_45] : memref<16x16xbf16, #tpu.memory_space<vmem>>, vector<16x16xbf16>
    %cst_46 = arith.constant dense<0.000000e+00> : vector<16x16xf32>
    %134 = tpu.matmul %132, %133, %cst_46 {dimension_numbers = #tpu.dot_dimension_numbers<[1], [0], [0], [1], [0, 0, 1, 1], [], []>} : vector<16x16xbf16>, vector<16x16xbf16>, vector<16x16xf32> -> vector<16x16xf32>
    %c0_47 = arith.constant 0 : index
    %c0_48 = arith.constant 0 : index
    %135 = vector.load %arg13[%c0_47, %c0_48] : memref<1x16xf32, #tpu.memory_space<vmem>>, vector<1x16xf32>
    %136 = vector.shape_cast %135 : vector<1x16xf32> to vector<16xf32>
    %137 = vector.shape_cast %136 : vector<16xf32> to vector<1x16xf32>
    %138 = vector.broadcast %137 : vector<1x16xf32> to vector<16x16xf32>
    %139 = arith.addf %134, %138 : vector<16x16xf32>
    %140 = vector.shape_cast %139 : vector<16x16xf32> to vector<1x16x16xf32>
    %141 = tpu.transpose %140, [0, 2, 1] : vector<1x16x16xf32> -> vector<1x16x16xf32>
    %c0_49 = arith.constant 0 : index
    %c0_50 = arith.constant 0 : index
    %c0_51 = arith.constant 0 : index
    %142 = vector.load %arg14[%c0_49, %c0_50, %c0_51] : memref<1x16x16xf32, #tpu.memory_space<vmem>>, vector<1x16x16xf32>
    tpu.vector_store %arg14[%c0_49, %c0_50, %c0_51], %141 {strides = array<i32>} : memref<1x16x16xf32, #tpu.memory_space<vmem>>, vector<1x16x16xf32>,
    return
  }
  func.func @transform_0(%arg0: i32) -> (i32, i32, i32) {
    %c0_i32 = arith.constant 0 : i32
    %c0_i32_0 = arith.constant 0 : i32
    %c0_i32_1 = arith.constant 0 : i32
    return %arg0, %c0_i32, %c0_i32_0 : i32, i32, i32
  }
  func.func @transform_1(%arg0: i32) -> (i32, i32) {
    %c0_i32 = arith.constant 0 : i32
    %c0_i32_0 = arith.constant 0 : i32
    %c0_i32_1 = arith.constant 0 : i32
    return %c0_i32, %c0_i32_0 : i32, i32
  }
  func.func @transform_2(%arg0: i32) -> (i32, i32) {
    %c0_i32 = arith.constant 0 : i32
    %c0_i32_0 = arith.constant 0 : i32
    %c0_i32_1 = arith.constant 0 : i32
    return %c0_i32, %c0_i32_0 : i32, i32
  }
  func.func @transform_3(%arg0: i32) -> (i32, i32) {
    %c0_i32 = arith.constant 0 : i32
    %c0_i32_0 = arith.constant 0 : i32
    %c0_i32_1 = arith.constant 0 : i32
    return %c0_i32, %c0_i32_0 : i32, i32
  }
  func.func @transform_4(%arg0: i32) -> (i32, i32) {
    %c0_i32 = arith.constant 0 : i32
    %c0_i32_0 = arith.constant 0 : i32
    %c0_i32_1 = arith.constant 0 : i32
    return %c0_i32, %c0_i32_0 : i32, i32
  }
  func.func @transform_5(%arg0: i32) -> (i32, i32) {
    %c0_i32 = arith.constant 0 : i32
    %c0_i32_0 = arith.constant 0 : i32
    %c0_i32_1 = arith.constant 0 : i32
    return %c0_i32, %c0_i32_0 : i32, i32
  }
  func.func @transform_6(%arg0: i32) -> (i32, i32) {
    %c0_i32 = arith.constant 0 : i32
    %c0_i32_0 = arith.constant 0 : i32
    %c0_i32_1 = arith.constant 0 : i32
    return %c0_i32, %c0_i32_0 : i32, i32
  }
  func.func @transform_7(%arg0: i32) -> (i32, i32) {
    %c0_i32 = arith.constant 0 : i32
    %c0_i32_0 = arith.constant 0 : i32
    %c0_i32_1 = arith.constant 0 : i32
    return %c0_i32, %c0_i32_0 : i32, i32
  }
  func.func @transform_8(%arg0: i32) -> (i32, i32) {
    %c0_i32 = arith.constant 0 : i32
    %c0_i32_0 = arith.constant 0 : i32
    %c0_i32_1 = arith.constant 0 : i32
    return %c0_i32, %c0_i32_0 : i32, i32
  }
  func.func @transform_9(%arg0: i32) -> (i32, i32) {
    %c0_i32 = arith.constant 0 : i32
    %c0_i32_0 = arith.constant 0 : i32
    %c0_i32_1 = arith.constant 0 : i32
    return %c0_i32, %c0_i32_0 : i32, i32
  }
  func.func @transform_10(%arg0: i32) -> (i32, i32) {
    %c0_i32 = arith.constant 0 : i32
    %c0_i32_0 = arith.constant 0 : i32
    %c0_i32_1 = arith.constant 0 : i32
    return %c0_i32, %c0_i32_0 : i32, i32
  }
  func.func @transform_11(%arg0: i32) -> (i32, i32) {
    %c0_i32 = arith.constant 0 : i32
    %c0_i32_0 = arith.constant 0 : i32
    %c0_i32_1 = arith.constant 0 : i32
    return %c0_i32, %c0_i32_0 : i32, i32
  }
  func.func @transform_12(%arg0: i32) -> (i32, i32) {
    %c0_i32 = arith.constant 0 : i32
    %c0_i32_0 = arith.constant 0 : i32
    %c0_i32_1 = arith.constant 0 : i32
    return %c0_i32, %c0_i32_0 : i32, i32
  }
  func.func @transform_13(%arg0: i32) -> (i32, i32, i32) {
    %c0_i32 = arith.constant 0 : i32
    %c0_i32_0 = arith.constant 0 : i32
    %c0_i32_1 = arith.constant 0 : i32
    return %arg0, %c0_i32, %c0_i32_0 : i32, i32, i32
  }
}

</mosaic_0001>

<llo_original>
// kernel: tpu_custom_call.1
$region0: #{tpu_custom_call.1}
  #allocation0 [shape = 'u32[]', space=smem, size = 0x4, offset = 0x4, fixed_abs, tag = 'smem constant byte address 0x4 - core index']
  #allocation1 [shape = 'u32[144,128]{1,0:T(1,128)}', space=vmem, size = 0x12000, scoped, tag = 'internal scratch']
  %s0 = inlined_call_operand.vmem [shape: f32[2,8,8], index: 0, kind: input, shape index: {}]
  %s1 = inlined_call_operand.hbm [shape: bf16[8,64], index: 1, kind: input, shape index: {}]
  %s2 = inlined_call_operand.vmem [shape: f32[1,16], index: 2, kind: input, shape index: {}]
  %s3 = inlined_call_operand.vmem [shape: bf16[16,48], index: 3, kind: input, shape index: {}]
  %s4 = inlined_call_operand.vmem [shape: f32[1,16], index: 4, kind: input, shape index: {}]
  %s5 = inlined_call_operand.vmem [shape: bf16[16,48], index: 5, kind: input, shape index: {}]
  %s6 = inlined_call_operand.hbm [shape: f32[1,16], index: 6, kind: input, shape index: {}]
  %s7 = inlined_call_operand.vmem [shape: f32[16,4], index: 7, kind: input, shape index: {}]
  %s8 = inlined_call_operand.hbm [shape: f32[1,4], index: 8, kind: input, shape index: {}]
  %s9 = inlined_call_operand.vmem [shape: f32[4,16], index: 9, kind: input, shape index: {}]
  %s10 = inlined_call_operand.vmem [shape: f32[1,16], index: 10, kind: input, shape index: {}]
  %s11 = inlined_call_operand.vmem [shape: bf16[16,16], index: 11, kind: input, shape index: {}]
  %s12 = inlined_call_operand.vmem [shape: f32[1,16], index: 12, kind: input, shape index: {}]
  %s13 = inlined_call_operand.hbm [shape: f32[2,16,16], index: 13, kind: output, shape index: {}]
  %s14 = sld [smem:[#allocation0]]
  $region97: #{tpu_custom_call.1} parent=0
    _
  %s16 = ssub.s32 1, %s14
  %s17 = scalar_select 0, %s16, %s14
  $region1: #{tpu_custom_call.1} parent=0
    #allocation2 [shape = 'u8[2048]{0}', space=vmem, size = 0x800, scoped, tag = 'input window, operand 1, single buffered']
    #allocation3 [shape = 's32[2]{0}', space=sflag, size = 0x8, scoped, tag = 'scoped memory for tpu_custom_call.1']
    #allocation4 [shape = 's32[2]{0}', space=sflag, size = 0x8, scoped, tag = 'scoped memory for tpu_custom_call.1']
    #allocation5 [shape = 'u8[512]{0}', space=vmem, size = 0x400, scoped, tag = 'input window, operand 6, single buffered']
    #allocation6 [shape = 's32[1]{0}', space=sflag, size = 0x4, scoped, tag = 'scoped memory for tpu_custom_call.1']
    #allocation7 [shape = 'u8[512]{0}', space=vmem, size = 0x400, scoped, tag = 'input window, operand 8, single buffered']
    #allocation8 [shape = 'u8[16384]{0}', space=vmem, size = 0x4000, scoped, tag = 'output window, operand 0']
    %18 = vsyncpa [#allocation3], 0
    %19 = vsyncpa [#allocation6], 0
    %20 = vsyncpa [#allocation4], 0
    %s21 = scalar_lea.sflag [#allocation4], 1
    %22 = vsyncpa %s21, 0
    loop: start=0, step=1, limit=4
    $region2: #{tpu_custom_call.1} parent=1 // loop_pre_header
      _
    $region3: #{tpu_custom_call.1} parent=1 // loop_header
      %s24 = sphi 0, %s28
      %p25 = scmp.ge.s32.totalorder %s24, 4
      %s34 = sphi 0, %s36
      %s37 = sphi 0, %s34
      %s38 = sphi 0, %s37
      %s54 = sphi 0, %s38
      %s58 = sphi 0, %s58
      %s60 = sphi 0, %s58
      %s61 = sphi 0, %s60
      %s75 = sphi 0, %s61
      %s79 = sphi 0, %s79
      %s81 = sphi 0, %s79
      %s82 = sphi 0, %s81
      %s96 = sphi 0, %s82
      %s100 = sphi 0, %s100
      %s102 = sphi 0, %s100
      %s103 = sphi 0, %s102
      %s117 = sphi 0, %s103
      %s121 = sphi 0, %s121
      %s123 = sphi 0, %s121
      %s124 = sphi 0, %s123
      %s138 = sphi 0, %s124
      %s142 = sphi 0, %s142
      %s144 = sphi 0, %s142
      %s145 = sphi 0, %s144
      %s159 = sphi 0, %s145
      %s163 = sphi 0, %s163
      %s165 = sphi 0, %s163
      %s166 = sphi 0, %s165
      %s180 = sphi 0, %s166
      %s184 = sphi 0, %s184
      %s186 = sphi 0, %s184
      %s187 = sphi 0, %s186
      %s201 = sphi 0, %s187
      %s205 = sphi 0, %s205
      %s207 = sphi 0, %s205
      %s208 = sphi 0, %s207
      %s222 = sphi 0, %s208
      %s226 = sphi 0, %s226
      %s228 = sphi 0, %s226
      %s229 = sphi 0, %s228
      %s243 = sphi 0, %s229
      %s247 = sphi 0, %s247
      %s249 = sphi 0, %s247
      %s250 = sphi 0, %s249
      %s264 = sphi 0, %s250
      %s268 = sphi 0, %s268
      %s270 = sphi 0, %s268
      %s271 = sphi 0, %s270
      %s285 = sphi 0, %s271
      %s289 = sphi 0, %s289
      %s291 = sphi 0, %s289
      %s292 = sphi 0, %s291
      %s306 = sphi 0, %s292
      %s312 = sphi 0, %s314
      %s315 = sphi 0, %s312
      %s316 = sphi 0, %s315
      %s332 = sphi 0, %s316
    $region4: #{tpu_custom_call.1} parent=1 // loop_header_branch
      %27 = sbr.rel (%p25) target = $region8
    $region5: #{tpu_custom_call.1} parent=1 // loop_body
      %s29 = ssub.s32 %s24, 1
      %s30 = ssub.s32 %s24, 2
      %s31 = sadd.s32 %s24, 1
      %s32 = ssub.s32 %s24, %s31
      %p33 = scmp.eq.s32.totalorder %s32, 0
      %s35 = sadd.s32 %s34, 1
      %s36 = scalar_select %p33, %s34, %s35
      %p39 = pneg %p33
      %p40 = scmp.eq.s32.totalorder %s24, 1
      %p41 = por %p39, %p40
      %p42 = scmp.ne.s32.totalorder %s34, %s37
      %p43 = scmp.eq.s32.totalorder %s24, 0
      %p44 = por %p42, %p43
      %p45 = scmp.ne.s32.totalorder %s34, %s37
      %p46 = scmp.eq.s32.totalorder %s29, 1
      %p47 = por %p45, %p46
      %p48 = scmp.ne.s32.totalorder %s37, %s38
      %p49 = scmp.eq.s32.totalorder %s29, 0
      %p50 = por %p48, %p49
      %p51 = scmp.ne.s32.totalorder %s37, %s38
      %p52 = scmp.eq.s32.totalorder %s30, 1
      %p53 = por %p51, %p52
      %p55 = scmp.ne.s32.totalorder %s38, %s54
      %p56 = scmp.eq.s32.totalorder %s30, 0
      %p57 = por %p55, %p56
      %s59 = sadd.s32 %s58, 1
      %p62 = scmp.eq.s32.totalorder %s24, 1
      %p63 = scmp.ne.s32.totalorder %s58, %s60
      %p64 = scmp.eq.s32.totalorder %s24, 0
      %p65 = por %p63, %p64
      %p66 = scmp.ne.s32.totalorder %s58, %s60
      %p67 = scmp.eq.s32.totalorder %s29, 1
      %p68 = por %p66, %p67
      %p69 = scmp.ne.s32.totalorder %s60, %s61
      %p70 = scmp.eq.s32.totalorder %s29, 0
      %p71 = por %p69, %p70
      %p72 = scmp.ne.s32.totalorder %s60, %s61
      %p73 = scmp.eq.s32.totalorder %s30, 1
      %p74 = por %p72, %p73
      %p76 = scmp.ne.s32.totalorder %s61, %s75
      %p77 = scmp.eq.s32.totalorder %s30, 0
      %p78 = por %p76, %p77
      %s80 = sadd.s32 %s79, 1
      %p83 = scmp.eq.s32.totalorder %s24, 1
      %p84 = scmp.ne.s32.totalorder %s79, %s81
      %p85 = scmp.eq.s32.totalorder %s24, 0
      %p86 = por %p84, %p85
      %p87 = scmp.ne.s32.totalorder %s79, %s81
      %p88 = scmp.eq.s32.totalorder %s29, 1
      %p89 = por %p87, %p88
      %p90 = scmp.ne.s32.totalorder %s81, %s82
      %p91 = scmp.eq.s32.totalorder %s29, 0
      %p92 = por %p90, %p91
      %p93 = scmp.ne.s32.totalorder %s81, %s82
      %p94 = scmp.eq.s32.totalorder %s30, 1
      %p95 = por %p93, %p94
      %p97 = scmp.ne.s32.totalorder %s82, %s96
      %p98 = scmp.eq.s32.totalorder %s30, 0
      %p99 = por %p97, %p98
      %s101 = sadd.s32 %s100, 1
      %p104 = scmp.eq.s32.totalorder %s24, 1
      %p105 = scmp.ne.s32.totalorder %s100, %s102
      %p106 = scmp.eq.s32.totalorder %s24, 0
      %p107 = por %p105, %p106
      %p108 = scmp.ne.s32.totalorder %s100, %s102
      %p109 = scmp.eq.s32.totalorder %s29, 1
      %p110 = por %p108, %p109
      %p111 = scmp.ne.s32.totalorder %s102, %s103
      %p112 = scmp.eq.s32.totalorder %s29, 0
      %p113 = por %p111, %p112
      %p114 = scmp.ne.s32.totalorder %s102, %s103
      %p115 = scmp.eq.s32.totalorder %s30, 1
      %p116 = por %p114, %p115
      %p118 = scmp.ne.s32.totalorder %s103, %s117
      %p119 = scmp.eq.s32.totalorder %s30, 0
      %p120 = por %p118, %p119
      %s122 = sadd.s32 %s121, 1
      %p125 = scmp.eq.s32.totalorder %s24, 1
      %p126 = scmp.ne.s32.totalorder %s121, %s123
      %p127 = scmp.eq.s32.totalorder %s24, 0
      %p128 = por %p126, %p127
      %p129 = scmp.ne.s32.totalorder %s121, %s123
      %p130 = scmp.eq.s32.totalorder %s29, 1
      %p131 = por %p129, %p130
      %p132 = scmp.ne.s32.totalorder %s123, %s124
      %p133 = scmp.eq.s32.totalorder %s29, 0
      %p134 = por %p132, %p133
      %p135 = scmp.ne.s32.totalorder %s123, %s124
      %p136 = scmp.eq.s32.totalorder %s30, 1
      %p137 = por %p135, %p136
      %p139 = scmp.ne.s32.totalorder %s124, %s138
      %p140 = scmp.eq.s32.totalorder %s30, 0
      %p141 = por %p139, %p140
      %s143 = sadd.s32 %s142, 1
      %p146 = scmp.eq.s32.totalorder %s24, 1
      %p147 = scmp.ne.s32.totalorder %s142, %s144
      %p148 = scmp.eq.s32.totalorder %s24, 0
      %p149 = por %p147, %p148
      %p150 = scmp.ne.s32.totalorder %s142, %s144
      %p151 = scmp.eq.s32.totalorder %s29, 1
      %p152 = por %p150, %p151
      %p153 = scmp.ne.s32.totalorder %s144, %s145
      %p154 = scmp.eq.s32.totalorder %s29, 0
      %p155 = por %p153, %p154
      %p156 = scmp.ne.s32.totalorder %s144, %s145
      %p157 = scmp.eq.s32.totalorder %s30, 1
      %p158 = por %p156, %p157
      %p160 = scmp.ne.s32.totalorder %s145, %s159
      %p161 = scmp.eq.s32.totalorder %s30, 0
      %p162 = por %p160, %p161
      %s164 = sadd.s32 %s163, 1
      %p167 = scmp.eq.s32.totalorder %s24, 1
      %p168 = scmp.ne.s32.totalorder %s163, %s165
      %p169 = scmp.eq.s32.totalorder %s24, 0
      %p170 = por %p168, %p169
      %p171 = scmp.ne.s32.totalorder %s163, %s165
      %p172 = scmp.eq.s32.totalorder %s29, 1
      %p173 = por %p171, %p172
      %p174 = scmp.ne.s32.totalorder %s165, %s166
      %p175 = scmp.eq.s32.totalorder %s29, 0
      %p176 = por %p174, %p175
      %p177 = scmp.ne.s32.totalorder %s165, %s166
      %p178 = scmp.eq.s32.totalorder %s30, 1
      %p179 = por %p177, %p178
      %p181 = scmp.ne.s32.totalorder %s166, %s180
      %p182 = scmp.eq.s32.totalorder %s30, 0
      %p183 = por %p181, %p182
      %s185 = sadd.s32 %s184, 1
      %p188 = scmp.eq.s32.totalorder %s24, 1
      %p189 = scmp.ne.s32.totalorder %s184, %s186
      %p190 = scmp.eq.s32.totalorder %s24, 0
      %p191 = por %p189, %p190
      %p192 = scmp.ne.s32.totalorder %s184, %s186
      %p193 = scmp.eq.s32.totalorder %s29, 1
      %p194 = por %p192, %p193
      %p195 = scmp.ne.s32.totalorder %s186, %s187
      %p196 = scmp.eq.s32.totalorder %s29, 0
      %p197 = por %p195, %p196
      %p198 = scmp.ne.s32.totalorder %s186, %s187
      %p199 = scmp.eq.s32.totalorder %s30, 1
      %p200 = por %p198, %p199
      %p202 = scmp.ne.s32.totalorder %s187, %s201
      %p203 = scmp.eq.s32.totalorder %s30, 0
      %p204 = por %p202, %p203
      %s206 = sadd.s32 %s205, 1
      %p209 = scmp.eq.s32.totalorder %s24, 1
      %p210 = scmp.ne.s32.totalorder %s205, %s207
      %p211 = scmp.eq.s32.totalorder %s24, 0
      %p212 = por %p210, %p211
      %p213 = scmp.ne.s32.totalorder %s205, %s207
      %p214 = scmp.eq.s32.totalorder %s29, 1
      %p215 = por %p213, %p214
      %p216 = scmp.ne.s32.totalorder %s207, %s208
      %p217 = scmp.eq.s32.totalorder %s29, 0
      %p218 = por %p216, %p217
      %p219 = scmp.ne.s32.totalorder %s207, %s208
      %p220 = scmp.eq.s32.totalorder %s30, 1
      %p221 = por %p219, %p220
      %p223 = scmp.ne.s32.totalorder %s208, %s222
      %p224 = scmp.eq.s32.totalorder %s30, 0
      %p225 = por %p223, %p224
      %s227 = sadd.s32 %s226, 1
      %p230 = scmp.eq.s32.totalorder %s24, 1
      %p231 = scmp.ne.s32.totalorder %s226, %s228
      %p232 = scmp.eq.s32.totalorder %s24, 0
      %p233 = por %p231, %p232
      %p234 = scmp.ne.s32.totalorder %s226, %s228
      %p235 = scmp.eq.s32.totalorder %s29, 1
      %p236 = por %p234, %p235
      %p237 = scmp.ne.s32.totalorder %s228, %s229
      %p238 = scmp.eq.s32.totalorder %s29, 0
      %p239 = por %p237, %p238
      %p240 = scmp.ne.s32.totalorder %s228, %s229
      %p241 = scmp.eq.s32.totalorder %s30, 1
      %p242 = por %p240, %p241
      %p244 = scmp.ne.s32.totalorder %s229, %s243
      %p245 = scmp.eq.s32.totalorder %s30, 0
      %p246 = por %p244, %p245
      %s248 = sadd.s32 %s247, 1
      %p251 = scmp.eq.s32.totalorder %s24, 1
      %p252 = scmp.ne.s32.totalorder %s247, %s249
      %p253 = scmp.eq.s32.totalorder %s24, 0
      %p254 = por %p252, %p253
      %p255 = scmp.ne.s32.totalorder %s247, %s249
      %p256 = scmp.eq.s32.totalorder %s29, 1
      %p257 = por %p255, %p256
      %p258 = scmp.ne.s32.totalorder %s249, %s250
      %p259 = scmp.eq.s32.totalorder %s29, 0
      %p260 = por %p258, %p259
      %p261 = scmp.ne.s32.totalorder %s249, %s250
      %p262 = scmp.eq.s32.totalorder %s30, 1
      %p263 = por %p261, %p262
      %p265 = scmp.ne.s32.totalorder %s250, %s264
      %p266 = scmp.eq.s32.totalorder %s30, 0
      %p267 = por %p265, %p266
      %s269 = sadd.s32 %s268, 1
      %p272 = scmp.eq.s32.totalorder %s24, 1
      %p273 = scmp.ne.s32.totalorder %s268, %s270
      %p274 = scmp.eq.s32.totalorder %s24, 0
      %p275 = por %p273, %p274
      %p276 = scmp.ne.s32.totalorder %s268, %s270
      %p277 = scmp.eq.s32.totalorder %s29, 1
      %p278 = por %p276, %p277
      %p279 = scmp.ne.s32.totalorder %s270, %s271
      %p280 = scmp.eq.s32.totalorder %s29, 0
      %p281 = por %p279, %p280
      %p282 = scmp.ne.s32.totalorder %s270, %s271
      %p283 = scmp.eq.s32.totalorder %s30, 1
      %p284 = por %p282, %p283
      %p286 = scmp.ne.s32.totalorder %s271, %s285
      %p287 = scmp.eq.s32.totalorder %s30, 0
      %p288 = por %p286, %p287
      %s290 = sadd.s32 %s289, 1
      %p293 = scmp.eq.s32.totalorder %s24, 1
      %p294 = scmp.ne.s32.totalorder %s289, %s291
      %p295 = scmp.eq.s32.totalorder %s24, 0
      %p296 = por %p294, %p295
      %p297 = scmp.ne.s32.totalorder %s289, %s291
      %p298 = scmp.eq.s32.totalorder %s29, 1
      %p299 = por %p297, %p298
      %p300 = scmp.ne.s32.totalorder %s291, %s292
      %p301 = scmp.eq.s32.totalorder %s29, 0
      %p302 = por %p300, %p301
      %p303 = scmp.ne.s32.totalorder %s291, %s292
      %p304 = scmp.eq.s32.totalorder %s30, 1
      %p305 = por %p303, %p304
      %p307 = scmp.ne.s32.totalorder %s292, %s306
      %p308 = scmp.eq.s32.totalorder %s30, 0
      %p309 = por %p307, %p308
      %s310 = ssub.s32 %s24, %s31
      %p311 = scmp.eq.s32.totalorder %s310, 0
      %s313 = sadd.s32 %s312, 1
      %s314 = scalar_select %p311, %s312, %s313
      %p317 = pneg %p311
      %p318 = scmp.eq.s32.totalorder %s24, 1
      %p319 = por %p317, %p318
      %p320 = scmp.ne.s32.totalorder %s312, %s315
      %p321 = scmp.eq.s32.totalorder %s24, 0
      %p322 = por %p320, %p321
      %p323 = scmp.ne.s32.totalorder %s312, %s315
      %p324 = scmp.eq.s32.totalorder %s29, 1
      %p325 = por %p323, %p324
      %p326 = scmp.ne.s32.totalorder %s315, %s316
      %p327 = scmp.eq.s32.totalorder %s29, 0
      %p328 = por %p326, %p327
      %p329 = scmp.ne.s32.totalorder %s315, %s316
      %p330 = scmp.eq.s32.totalorder %s30, 1
      %p331 = por %p329, %p330
      %p333 = scmp.ne.s32.totalorder %s316, %s332
      %p334 = scmp.eq.s32.totalorder %s30, 0
      %p335 = por %p333, %p334
      %p336 = scmp.le.s32.totalorder 1, %s24
      %p337 = scmp.lt.s32.totalorder %s24, 3
      %p338 = pnand %p336, %p337
      %p339 = pneg %p338
      // Predicated region
      $region9: #{tpu_custom_call.1} parent=5 // pred_check
        _
      $region10: #{tpu_custom_call.1} parent=5 // pred_check_branch
        %341 = sbr.rel (%p338) target = $region12
      $region11: #{tpu_custom_call.1} parent=5 // pred_region
        %s342 = ssub.s32 %s24, 1
        // Predicated region
        $region13: #{tpu_custom_call.1} parent=11 // pred_check
          %p343 = pneg %p71
        $region14: #{tpu_custom_call.1} parent=11 // pred_check_branch
          %345 = sbr.rel (%p343) target = $region16
        $region15: #{tpu_custom_call.1} parent=11 // pred_region
          %s347 = ssub.s32 64, 64
          %348 = vsyncadd [#allocation3], %s347
          %s350 = sshll.u32 [#allocation2], 4
          %s351 = int_to_ptr.vmem [resolvable:$true] %s350
          %353 = dma.hbm_to_vmem [thread:$0]  %s1, 64, %s351, [#allocation3]
        $region16: #{tpu_custom_call.1} parent=11 // pred_fallthru
          _
        // Predicated region
        $region17: #{tpu_custom_call.1} parent=11 // pred_check
          %p354 = pneg %p92
        $region18: #{tpu_custom_call.1} parent=11 // pred_check_branch
          %356 = sbr.rel (%p354) target = $region20
        $region19: #{tpu_custom_call.1} parent=11 // pred_region
          _
        $region20: #{tpu_custom_call.1} parent=11 // pred_fallthru
          _
        // Predicated region
        $region21: #{tpu_custom_call.1} parent=11 // pred_check
          %p357 = pneg %p113
        $region22: #{tpu_custom_call.1} parent=11 // pred_check_branch
          %359 = sbr.rel (%p357) target = $region24
        $region23: #{tpu_custom_call.1} parent=11 // pred_region
          _
        $region24: #{tpu_custom_call.1} parent=11 // pred_fallthru
          _
        // Predicated region
        $region25: #{tpu_custom_call.1} parent=11 // pred_check
          %p360 = pneg %p134
        $region26: #{tpu_custom_call.1} parent=11 // pred_check_branch
          %362 = sbr.rel (%p360) target = $region28
        $region27: #{tpu_custom_call.1} parent=11 // pred_region
          _
        $region28: #{tpu_custom_call.1} parent=11 // pred_fallthru
          _
        // Predicated region
        $region29: #{tpu_custom_call.1} parent=11 // pred_check
          %p363 = pneg %p155
        $region30: #{tpu_custom_call.1} parent=11 // pred_check_branch
          %365 = sbr.rel (%p363) target = $region32
        $region31: #{tpu_custom_call.1} parent=11 // pred_region
          _
        $region32: #{tpu_custom_call.1} parent=11 // pred_fallthru
          _
        // Predicated region
        $region33: #{tpu_custom_call.1} parent=11 // pred_check
          %p366 = pneg %p176
        $region34: #{tpu_custom_call.1} parent=11 // pred_check_branch
          %368 = sbr.rel (%p366) target = $region36
        $region35: #{tpu_custom_call.1} parent=11 // pred_region
          %s370 = ssub.s32 16, 16
          %371 = vsyncadd [#allocation6], %s370
          %s373 = sshll.u32 [#allocation5], 4
          %s374 = int_to_ptr.vmem [resolvable:$true] %s373
          %376 = dma.hbm_to_vmem [thread:$0]  %s6, 16, %s374, [#allocation6]
        $region36: #{tpu_custom_call.1} parent=11 // pred_fallthru
          _
        // Predicated region
        $region37: #{tpu_custom_call.1} parent=11 // pred_check
          %p377 = pneg %p197
        $region38: #{tpu_custom_call.1} parent=11 // pred_check_branch
          %379 = sbr.rel (%p377) target = $region40
        $region39: #{tpu_custom_call.1} parent=11 // pred_region
          _
        $region40: #{tpu_custom_call.1} parent=11 // pred_fallthru
          _
        // Predicated region
        $region41: #{tpu_custom_call.1} parent=11 // pred_check
          %p380 = pneg %p218
        $region42: #{tpu_custom_call.1} parent=11 // pred_check_branch
          %382 = sbr.rel (%p380) target = $region44
        $region43: #{tpu_custom_call.1} parent=11 // pred_region
          %s384 = ssub.s32 16, 16
          %385 = vsyncadd [#allocation6], %s384
          %s387 = sshll.u32 [#allocation7], 4
          %s388 = int_to_ptr.vmem [resolvable:$true] %s387
          %390 = dma.hbm_to_vmem [thread:$0]  %s8, 16, %s388, [#allocation6]
        $region44: #{tpu_custom_call.1} parent=11 // pred_fallthru
          _
        // Predicated region
        $region45: #{tpu_custom_call.1} parent=11 // pred_check
          %p391 = pneg %p239
        $region46: #{tpu_custom_call.1} parent=11 // pred_check_branch
          %393 = sbr.rel (%p391) target = $region48
        $region47: #{tpu_custom_call.1} parent=11 // pred_region
          _
        $region48: #{tpu_custom_call.1} parent=11 // pred_fallthru
          _
        // Predicated region
        $region49: #{tpu_custom_call.1} parent=11 // pred_check
          %p394 = pneg %p260
        $region50: #{tpu_custom_call.1} parent=11 // pred_check_branch
          %396 = sbr.rel (%p394) target = $region52
        $region51: #{tpu_custom_call.1} parent=11 // pred_region
          _
        $region52: #{tpu_custom_call.1} parent=11 // pred_fallthru
          _
        // Predicated region
        $region53: #{tpu_custom_call.1} parent=11 // pred_check
          %p397 = pneg %p281
        $region54: #{tpu_custom_call.1} parent=11 // pred_check_branch
          %399 = sbr.rel (%p397) target = $region56
        $region55: #{tpu_custom_call.1} parent=11 // pred_region
          _
        $region56: #{tpu_custom_call.1} parent=11 // pred_fallthru
          _
        // Predicated region
        $region57: #{tpu_custom_call.1} parent=11 // pred_check
          %p400 = pneg %p302
        $region58: #{tpu_custom_call.1} parent=11 // pred_check_branch
          %402 = sbr.rel (%p400) target = $region60
        $region59: #{tpu_custom_call.1} parent=11 // pred_region
          _
        $region60: #{tpu_custom_call.1} parent=11 // pred_fallthru
          _
      $region12: #{tpu_custom_call.1} parent=5 // pred_fallthru
        _
      %p403 = scmp.lt.s32.totalorder %s24, 2
      // Predicated region
      $region61: #{tpu_custom_call.1} parent=5 // pred_check
        %p404 = pneg %p403
      $region62: #{tpu_custom_call.1} parent=5 // pred_check_branch
        %406 = sbr.rel (%p404) target = $region64
      $region63: #{tpu_custom_call.1} parent=5 // pred_region
        // Predicated region
        $region65: #{tpu_custom_call.1} parent=63 // pred_check
          %p407 = pneg %p44
        $region66: #{tpu_custom_call.1} parent=63 // pred_check_branch
          %409 = sbr.rel (%p407) target = $region68
        $region67: #{tpu_custom_call.1} parent=63 // pred_region
          %p410 = scmp.lt.s32.totalorder %s24, 1
          %s411 = scalar_select %p410, %s24, 1
          %s412 = smul.addr %s411, 8
          %s413 = scalar_lea.vmem %s0, %s412
        $region68: #{tpu_custom_call.1} parent=63 // pred_fallthru
          _
      $region64: #{tpu_custom_call.1} parent=5 // pred_fallthru
        _
      %p414 = scmp.le.s32.totalorder 1, %s24
      %p415 = scmp.lt.s32.totalorder %s24, 3
      %p416 = pnand %p414, %p415
      %p417 = pneg %p416
      // Predicated region
      $region69: #{tpu_custom_call.1} parent=5 // pred_check
        _
      $region70: #{tpu_custom_call.1} parent=5 // pred_check_branch
        %419 = sbr.rel (%p416) target = $region72
      $region71: #{tpu_custom_call.1} parent=5 // pred_region
        %s420 = ssub.s32 %s24, 1
        // Predicated region
        $region73: #{tpu_custom_call.1} parent=71 // pred_check
          %p421 = pneg %p71
        $region74: #{tpu_custom_call.1} parent=71 // pred_check_branch
          %423 = sbr.rel (%p421) target = $region76
        $region75: #{tpu_custom_call.1} parent=71 // pred_region
          %424 = dma.done [#allocation3], 64
        $region76: #{tpu_custom_call.1} parent=71 // pred_fallthru
          _
        // Predicated region
        $region77: #{tpu_custom_call.1} parent=71 // pred_check
          %p425 = pneg %p176
        $region78: #{tpu_custom_call.1} parent=71 // pred_check_branch
          %427 = sbr.rel (%p425) target = $region80
        $region79: #{tpu_custom_call.1} parent=71 // pred_region
          %428 = dma.done [#allocation6], 16
        $region80: #{tpu_custom_call.1} parent=71 // pred_fallthru
          _
        // Predicated region
        $region81: #{tpu_custom_call.1} parent=71 // pred_check
          %p429 = pneg %p218
        $region82: #{tpu_custom_call.1} parent=71 // pred_check_branch
          %431 = sbr.rel (%p429) target = $region84
        $region83: #{tpu_custom_call.1} parent=71 // pred_region
          %432 = dma.done [#allocation6], 16
        $region84: #{tpu_custom_call.1} parent=71 // pred_fallthru
          _
        %p433 = scmp.lt.s32.totalorder %s29, 1
        %s434 = scalar_select %p433, %s29, 1
        %s435 = smul.addr %s434, 8
        %s436 = scalar_lea.vmem %s0, %s435
        %p437 = pneg %p50
        %p438 = pneg %p47
        %p439 = pneg %p71
        %p440 = pneg %p68
        %p441 = pneg %p92
        %p442 = pneg %p89
        %p443 = pneg %p113
        %p444 = pneg %p110
        %p445 = pneg %p134
        %p446 = pneg %p131
        %p447 = pneg %p155
        %p448 = pneg %p152
        %p449 = pneg %p176
        %p450 = pneg %p173
        %p451 = pneg %p197
        %p452 = pneg %p194
        %p453 = pneg %p218
        %p454 = pneg %p215
        %p455 = pneg %p239
        %p456 = pneg %p236
        %p457 = pneg %p260
        %p458 = pneg %p257
        %p459 = pneg %p281
        %p460 = pneg %p278
        %p461 = pneg %p302
        %p462 = pneg %p299
        %p463 = pneg %p328
        %p464 = pneg %p325
        %s465 = sand.u32 %s315, 1
        %s466 = scalar_lea.sflag [#allocation4], %s465
        %s467 = sand.u32 %s315, 1
        %s468 = smul.addr %s467, 16
        %s469 = scalar_lea.vmem [#allocation8], %s468
        %p470 = scmp.lt.s32.totalorder %s29, 1
        %s471 = scalar_select %p470, %s29, 1
        %s472 = smul.addr %s471, 8
        %s473 = scalar_lea.vmem %s0, %s472
        %v475 = vld [vmem:[%s2] sm:$0x1]
        %v476 = vld [vmem:[%s4] sm:$0x1]
        %v477 = vld [vmem:[#allocation5] sm:$0x1]
        %v478 = vld [vmem:[%s473] sm:$0xff]
        %479 = vxpose.xlu0.b32.start [1/16] %v478, 128
        %480 = vxpose.xlu0.b32.cont [2/16] 0.0, 128
        %481 = vxpose.xlu0.b32.cont [3/16] 0.0, 128
        %482 = vxpose.xlu0.b32.cont [4/16] 0.0, 128
        %483 = vxpose.xlu0.b32.cont [5/16] 0.0, 128
        %484 = vxpose.xlu0.b32.cont [6/16] 0.0, 128
        %485 = vxpose.xlu0.b32.cont [7/16] 0.0, 128
        %486 = vxpose.xlu0.b32.cont [8/16] 0.0, 128
        %487 = vxpose.xlu0.b32.cont [9/16] 0.0, 128
        %488 = vxpose.xlu0.b32.cont [10/16] 0.0, 128
        %489 = vxpose.xlu0.b32.cont [11/16] 0.0, 128
        %490 = vxpose.xlu0.b32.cont [12/16] 0.0, 128
        %491 = vxpose.xlu0.b32.cont [13/16] 0.0, 128
        %492 = vxpose.xlu0.b32.cont [14/16] 0.0, 128
        %493 = vxpose.xlu0.b32.cont [15/16] 0.0, 128
        %494 = vxpose.xlu0.b32.end [16/16] 0.0, 128
        %v495 = vpop.trf.xlu0
        %v496 = vpop.trf.xlu0
        %v497 = vpop.trf.xlu0
        %v498 = vpop.trf.xlu0
        %v499 = vpop.trf.xlu0
        %v500 = vpop.trf.xlu0
        %v501 = vpop.trf.xlu0
        %v502 = vpop.trf.xlu0
        %v503 = vpop.trf.xlu0
        %v504 = vpop.trf.xlu0
        %v505 = vpop.trf.xlu0
        %v506 = vpop.trf.xlu0
        %v507 = vpop.trf.xlu0
        %v508 = vpop.trf.xlu0
        %v509 = vpop.trf.xlu0
        %v510 = vpop.trf.xlu0
        %v511 = vpack.c.bf16 %v495, %v495
        %v512 = vlaneseq
        %v513 = vshrl.u32 %v512, 7
        %v514 = vadd.s32 %v513, 8
        %v515 = vld [vmem:[#allocation2] sm:$0xf]
        %vm516 = vcmask 64512
        %v518 = vsel %vm516, %v511, 0
        %vm520 = vcmask 1043456
        %v522 = vsel %vm520, %v515, 0
        %524 = vmatprep.subr.bf16.mxu0 0
        %525 = vmatpush1.bf16.msra.mxu0 %v522
        %526 = vmatprep.subr.bf16.mxu0 0
        %527 = vmatpush1.bf16.msra.mxu0 0
        %528 = vmatprep.subr.bf16.mxu0 0
        %529 = vmatpush1.bf16.msra.mxu0 0
        %530 = vmatprep.subr.bf16.mxu0 0
        %531 = vmatpush1.bf16.msra.mxu0 0
        %532 = vmatprep.subr.bf16.mxu0 0
        %533 = vmatpush1.bf16.msra.mxu0 0
        %534 = vmatprep.subr.bf16.mxu0 0
        %535 = vmatpush1.bf16.msra.mxu0 0
        %536 = vmatprep.subr.bf16.mxu0 0
        %537 = vmatpush1.bf16.msra.mxu0 0
        %538 = vmatprep.subr.bf16.mxu0 0
        %539 = vmatpush1.bf16.msra.mxu0 0
        %540 = vmatprep.subr.bf16.mxu0 0
        %541 = vmatpush1.bf16.msra.mxu0 0
        %542 = vmatprep.subr.bf16.mxu0 0
        %543 = vmatpush1.bf16.msra.mxu0 0
        %544 = vmatprep.subr.bf16.mxu0 0
        %545 = vmatpush1.bf16.msra.mxu0 0
        %546 = vmatprep.subr.bf16.mxu0 0
        %547 = vmatpush1.bf16.msra.mxu0 0
        %548 = vmatprep.subr.bf16.mxu0 0
        %549 = vmatpush1.bf16.msra.mxu0 0
        %550 = vmatprep.subr.bf16.mxu0 0
        %551 = vmatpush1.bf16.msra.mxu0 0
        %552 = vmatprep.subr.bf16.mxu0 0
        %553 = vmatpush1.bf16.msra.mxu0 0
        %554 = vmatprep.subr.bf16.mxu0 0
        %555 = vmatpush1.bf16.msra.mxu0 0
        %556 = vmatprep.mubr.bf16.mxu0 0
        %557 = vmatmul.mubr.bf16.gmra.mrb[0].mxu0 %v518
        %v558 = vpop.f32.mrb[0].mxu0
        %v559 = vadd.f32 0.0, %v558
        %v560 = vpop.f32.mrb[0].mxu0
        %v561 = vpop.f32.mrb[0].mxu0
        %v562 = vpop.f32.mrb[0].mxu0
        %563 = vdwg.mxu0
        %565 = vrot.lane.b32.xlu0 %v559, 80
        %v566 = vpop.permute.xlu0 %565
        %v568 = vrot.slane %v566, 7
        %vm569 = vcmp.ge.s32.totalorder %v513, 1
        %v570 = vsel %vm569, %v568, 0.0
        %572 = vrot.lane.b32.xlu0 %v570, 16
        %v573 = vpop.permute.xlu0 %572
        %v575 = vadd.f32 %v559, %v573
        %v577 = vlaneseq
        %v578 = vshrl.u32 %v577, 7
        %v579 = vsub.s32 0, %v578
        %v580 = vrot.slane %v475, %v579
        %581 = vrot.lane.b32.xlu0 %v580, 16
        %v582 = vpop.permute.xlu0 %581
        %v584 = vadd.f32 %v575, %v582
        %v585 = vrot.slane %v559, 1
        %vm586 = vcmp.lt.s32.totalorder %v513, 7
        %v587 = vsel %vm586, %v585, 0.0
        %589 = vrot.lane.b32.xlu0 %v587, 32
        %v590 = vpop.permute.xlu0 %589
        %v592 = vadd.f32 %v559, %v590
        %593 = vrot.lane.b32.xlu0 %v580, 32
        %v594 = vpop.permute.xlu0 %593
        %v596 = vadd.f32 %v592, %v594
        %v598 = vcombine.high %v584, %v584
        %v600 = vunpack.c.l.s4 1966171168
        %v601 = vunpack.c.0.s8 %v600
        %v602 = vlaneseq
        %v603 = vshrl.u32 %v602, 7
        %v604 = vsub.s32 %v601, %v603
        %v605 = vrot.slane %v584, %v604
        %v607 = vunpack.c.l.s4 1966171168
        %v608 = vunpack.c.0.s8 %v607
        %v609 = vlaneseq
        %v610 = vshrl.u32 %v609, 7
        %v611 = vsub.s32 %v608, %v610
        %v612 = vrot.slane %v598, %v611
        %v613 = vcombine.high %v605, %v605
        %v614 = vcombine.high %v612, %v612
        %v616 = vunpack.c.l.s4 1966171168
        %v617 = vunpack.c.0.s8 %v616
        %v618 = vlaneseq
        %v619 = vshrl.u32 %v618, 7
        %v620 = vsub.s32 %v617, %v619
        %v621 = vrot.slane %v605, %v620
        %v623 = vunpack.c.l.s4 1966171168
        %v624 = vunpack.c.0.s8 %v623
        %v625 = vlaneseq
        %v626 = vshrl.u32 %v625, 7
        %v627 = vsub.s32 %v624, %v626
        %v628 = vrot.slane %v612, %v627
        %v630 = vunpack.c.l.s4 1966171168
        %v631 = vunpack.c.0.s8 %v630
        %v632 = vlaneseq
        %v633 = vshrl.u32 %v632, 7
        %v634 = vsub.s32 %v631, %v633
        %v635 = vrot.slane %v613, %v634
        %v637 = vunpack.c.l.s4 1966171168
        %v638 = vunpack.c.0.s8 %v637
        %v639 = vlaneseq
        %v640 = vshrl.u32 %v639, 7
        %v641 = vsub.s32 %v638, %v640
        %v642 = vrot.slane %v614, %v641
        %v643 = vcombine.high %v621, %v621
        %v644 = vcombine.high %v628, %v628
        %v645 = vcombine.high %v635, %v635
        %v646 = vcombine.high %v642, %v642
        %v656 = vcombine.high %v596, %v596
        %v658 = vunpack.c.l.s4 1966171168
        %v659 = vunpack.c.0.s8 %v658
        %v660 = vlaneseq
        %v661 = vshrl.u32 %v660, 7
        %v662 = vsub.s32 %v659, %v661
        %v663 = vrot.slane %v596, %v662
        %v665 = vunpack.c.l.s4 1966171168
        %v666 = vunpack.c.0.s8 %v665
        %v667 = vlaneseq
        %v668 = vshrl.u32 %v667, 7
        %v669 = vsub.s32 %v666, %v668
        %v670 = vrot.slane %v656, %v669
        %v671 = vcombine.high %v663, %v663
        %v672 = vcombine.high %v670, %v670
        %v674 = vunpack.c.l.s4 1966171168
        %v675 = vunpack.c.0.s8 %v674
        %v676 = vlaneseq
        %v677 = vshrl.u32 %v676, 7
        %v678 = vsub.s32 %v675, %v677
        %v679 = vrot.slane %v663, %v678
        %v681 = vunpack.c.l.s4 1966171168
        %v682 = vunpack.c.0.s8 %v681
        %v683 = vlaneseq
        %v684 = vshrl.u32 %v683, 7
        %v685 = vsub.s32 %v682, %v684
        %v686 = vrot.slane %v670, %v685
        %v688 = vunpack.c.l.s4 1966171168
        %v689 = vunpack.c.0.s8 %v688
        %v690 = vlaneseq
        %v691 = vshrl.u32 %v690, 7
        %v692 = vsub.s32 %v689, %v691
        %v693 = vrot.slane %v671, %v692
        %v695 = vunpack.c.l.s4 1966171168
        %v696 = vunpack.c.0.s8 %v695
        %v697 = vlaneseq
        %v698 = vshrl.u32 %v697, 7
        %v699 = vsub.s32 %v696, %v698
        %v700 = vrot.slane %v672, %v699
        %v701 = vcombine.high %v679, %v679
        %v702 = vcombine.high %v686, %v686
        %v703 = vcombine.high %v693, %v693
        %v704 = vcombine.high %v700, %v700
        %v705 = vlaneseq
        %v706 = vshrl.u32 %v705, 7
        %v707 = vsub.s32 0, %v706
        %v708 = vrot.slane %v679, %v707
        %v709 = vlaneseq
        %v710 = vshrl.u32 %v709, 7
        %v711 = vsub.s32 0, %v710
        %v712 = vrot.slane %v693, %v711
        %v713 = vlaneseq
        %v714 = vshrl.u32 %v713, 7
        %v715 = vsub.s32 0, %v714
        %v716 = vrot.slane %v701, %v715
        %v717 = vlaneseq
        %v718 = vshrl.u32 %v717, 7
        %v719 = vsub.s32 0, %v718
        %v720 = vrot.slane %v703, %v719
        %v721 = vlaneseq
        %v722 = vshrl.u32 %v721, 7
        %v723 = vsub.s32 0, %v722
        %v724 = vrot.slane %v686, %v723
        %v725 = vlaneseq
        %v726 = vshrl.u32 %v725, 7
        %v727 = vsub.s32 0, %v726
        %v728 = vrot.slane %v700, %v727
        %v729 = vlaneseq
        %v730 = vshrl.u32 %v729, 7
        %v731 = vsub.s32 0, %v730
        %v732 = vrot.slane %v702, %v731
        %v733 = vlaneseq
        %v734 = vshrl.u32 %v733, 7
        %v735 = vsub.s32 0, %v734
        %v736 = vrot.slane %v704, %v735
        %737 = vrot.lane.b32.xlu0 %v708, 112
        %v738 = vpop.permute.xlu0 %737
        %739 = vrot.lane.b32.xlu0 %v712, 112
        %v740 = vpop.permute.xlu0 %739
        %741 = vrot.lane.b32.xlu0 %v716, 112
        %v742 = vpop.permute.xlu0 %741
        %743 = vrot.lane.b32.xlu0 %v720, 112
        %v744 = vpop.permute.xlu0 %743
        %745 = vrot.lane.b32.xlu0 %v724, 112
        %v746 = vpop.permute.xlu0 %745
        %747 = vrot.lane.b32.xlu0 %v728, 112
        %v748 = vpop.permute.xlu0 %747
        %749 = vrot.lane.b32.xlu0 %v732, 112
        %v750 = vpop.permute.xlu0 %749
        %751 = vrot.lane.b32.xlu0 %v736, 112
        %v752 = vpop.permute.xlu0 %751
        %vm761 = vcmask 1040384
        %v762 = vsel %vm761, %v621, %v738
        %v763 = vsel %vm761, %v635, %v740
        %v764 = vsel %vm761, %v643, %v742
        %v765 = vsel %vm761, %v645, %v744
        %v766 = vsel %vm761, %v628, %v746
        %v767 = vsel %vm761, %v642, %v748
        %v768 = vsel %vm761, %v644, %v750
        %v769 = vsel %vm761, %v646, %v752
        %v778 = vcombine.low %v762, %v763
        %v779 = vcombine.low %v764, %v765
        %v781 = vunpack.c.l.s4 1983009808
        %v782 = vunpack.c.0.s8 %v781
        %v783 = vlaneseq
        %v784 = vshrl.u32 %v783, 7
        %v785 = vsub.s32 %v782, %v784
        %v786 = vrot.slane %v778, %v785
        %v788 = vunpack.c.l.s4 1983009808
        %v789 = vunpack.c.0.s8 %v788
        %v790 = vlaneseq
        %v791 = vshrl.u32 %v790, 7
        %v792 = vsub.s32 %v789, %v791
        %v793 = vrot.slane %v779, %v792
        %v794 = vcombine.low %v786, %v793
        %v795 = vcombine.low %v766, %v767
        %v796 = vcombine.low %v768, %v769
        %v798 = vunpack.c.l.s4 1983009808
        %v799 = vunpack.c.0.s8 %v798
        %v800 = vlaneseq
        %v801 = vshrl.u32 %v800, 7
        %v802 = vsub.s32 %v799, %v801
        %v803 = vrot.slane %v795, %v802
        %v805 = vunpack.c.l.s4 1983009808
        %v806 = vunpack.c.0.s8 %v805
        %v807 = vlaneseq
        %v808 = vshrl.u32 %v807, 7
        %v809 = vsub.s32 %v806, %v808
        %v810 = vrot.slane %v796, %v809
        %v811 = vcombine.low %v803, %v810
        %v814 = vpack.c.bf16 %v811, %v794
        %v815 = vld [vmem:[%s3] sm:$0xf]
        %v816 = vld [vmem:[%s3 + $0x4] sm:$0xf]
        %818 = vrot.lane.b32.xlu0 %v814, 112
        %v819 = vpop.permute.xlu0 %818
        %v822 = vunpack.c.l.b16 %v815
        %v823 = vunpack.c.l.b16 %v816
        %v824 = vpack.c.b16 %v823, %v822
        %vm826 = vcmask 130048
        %v828 = vsel %vm826, %v819, 0
        %830 = vmatprep.subr.bf16.mxu0 0
        %831 = vmatpush1.bf16.msra.mxu0 %v824
        %832 = vmatprep.subr.bf16.mxu0 0
        %833 = vmatpush1.bf16.msra.mxu0 0
        %834 = vmatprep.subr.bf16.mxu0 0
        %835 = vmatpush1.bf16.msra.mxu0 0
        %836 = vmatprep.subr.bf16.mxu0 0
        %837 = vmatpush1.bf16.msra.mxu0 0
        %838 = vmatprep.subr.bf16.mxu0 0
        %839 = vmatpush1.bf16.msra.mxu0 0
        %840 = vmatprep.subr.bf16.mxu0 0
        %841 = vmatpush1.bf16.msra.mxu0 0
        %842 = vmatprep.subr.bf16.mxu0 0
        %843 = vmatpush1.bf16.msra.mxu0 0
        %844 = vmatprep.subr.bf16.mxu0 0
        %845 = vmatpush1.bf16.msra.mxu0 0
        %846 = vmatprep.subr.bf16.mxu0 0
        %847 = vmatpush1.bf16.msra.mxu0 0
        %848 = vmatprep.subr.bf16.mxu0 0
        %849 = vmatpush1.bf16.msra.mxu0 0
        %850 = vmatprep.subr.bf16.mxu0 0
        %851 = vmatpush1.bf16.msra.mxu0 0
        %852 = vmatprep.subr.bf16.mxu0 0
        %853 = vmatpush1.bf16.msra.mxu0 0
        %854 = vmatprep.subr.bf16.mxu0 0
        %855 = vmatpush1.bf16.msra.mxu0 0
        %856 = vmatprep.subr.bf16.mxu0 0
        %857 = vmatpush1.bf16.msra.mxu0 0
        %858 = vmatprep.subr.bf16.mxu0 0
        %859 = vmatpush1.bf16.msra.mxu0 0
        %860 = vmatprep.subr.bf16.mxu0 0
        %861 = vmatpush1.bf16.msra.mxu0 0
        %862 = vmatprep.mubr.bf16.mxu0 0
        %863 = vmatmul.mubr.bf16.gmra.mrb[0].mxu0 %v828
        %v864 = vpop.f32.mrb[0].mxu0
        %v865 = vadd.f32 0.0, %v864
        %v866 = vpop.f32.mrb[0].mxu0
        %v867 = vpop.f32.mrb[0].mxu0
        %v868 = vadd.f32 0.0, %v867
        %v869 = vpop.f32.mrb[0].mxu0
        %870 = vdwg.mxu0
        %v871 = vrot.slane %v865, 1
        %v872 = vrot.slane %v868, 1
        %v873 = vsel %vm586, %v871, %v872
        %v874 = vsel %vm586, %v872, %v871
        %vm875 = vcmp.lt.s32.totalorder %v513, 15
        %vm876 = vcmp.lt.s32.totalorder %v514, 15
        %v877 = vsel %vm875, %v873, 0.0
        %v878 = vsel %vm876, %v874, 0.0
        %881 = vrot.lane.b32.xlu0 %v877, 16
        %v882 = vpop.permute.xlu0 %881
        %883 = vrot.lane.b32.xlu0 %v878, 16
        %v884 = vpop.permute.xlu0 %883
        %v887 = vadd.f32 %v865, %v882
        %v888 = vadd.f32 %v868, %v884
        %891 = vrot.lane.b32.xlu0 %v865, 96
        %v892 = vpop.permute.xlu0 %891
        %893 = vrot.lane.b32.xlu0 %v868, 96
        %v894 = vpop.permute.xlu0 %893
        %v897 = vrot.slane %v892, 7
        %v898 = vrot.slane %v894, 7
        %vm899 = vcmp.lt.s32.totalorder %v513, 1
        %v900 = vsel %vm899, %v897, %v898
        %v901 = vsel %vm899, %v898, %v897
        %vm902 = vcmp.ge.s32.totalorder %v514, 1
        %v903 = vsel %vm569, %v901, 0.0
        %v904 = vsel %vm902, %v900, 0.0
        %907 = vrot.lane.b32.xlu0 %v903, 16
        %v908 = vpop.permute.xlu0 %907
        %909 = vrot.lane.b32.xlu0 %v904, 16
        %v910 = vpop.permute.xlu0 %909
        %v913 = vadd.f32 %v887, %v908
        %v914 = vadd.f32 %v888, %v910
        %v916 = vlaneseq
        %v917 = vshrl.u32 %v916, 7
        %v918 = vsub.s32 0, %v917
        %v919 = vrot.slane %v476, %v918
        %920 = vrot.lane.b32.xlu0 %v919, 16
        %v921 = vpop.permute.xlu0 %920
        %v923 = vadd.f32 %v913, %v921
        %v924 = vadd.f32 %v914, %v921
        %v925 = vmax.f32 %v923, 0.0
        %v926 = vmax.f32 %v924, 0.0
        %v927 = vpack.c.bf16 %v926, %v925
        %v928 = vld [vmem:[%s5] sm:$0xf]
        %v929 = vld [vmem:[%s5 + $0x4] sm:$0xf]
        %932 = vrot.lane.b32.xlu0 %v927, 112
        %v933 = vpop.permute.xlu0 %932
        %934 = vrot.lane.b32.xlu0 0, 112
        %v935 = vpop.permute.xlu0 %934
        %v938 = vunpack.c.l.b16 %v928
        %v939 = vunpack.c.l.b16 %v929
        %v940 = vpack.c.b16 %v939, %v938
        %v943 = vsel %vm826, %v933, 0
        %v946 = vsel %vm826, %v935, 0
        %948 = vmatprep.subr.bf16.mxu0 0
        %949 = vmatpush1.bf16.msra.mxu0 %v940
        %950 = vmatprep.subr.bf16.mxu0 0
        %951 = vmatpush1.bf16.msra.mxu0 0
        %952 = vmatprep.subr.bf16.mxu0 0
        %953 = vmatpush1.bf16.msra.mxu0 0
        %954 = vmatprep.subr.bf16.mxu0 0
        %955 = vmatpush1.bf16.msra.mxu0 0
        %956 = vmatprep.subr.bf16.mxu0 0
        %957 = vmatpush1.bf16.msra.mxu0 0
        %958 = vmatprep.subr.bf16.mxu0 0
        %959 = vmatpush1.bf16.msra.mxu0 0
        %960 = vmatprep.subr.bf16.mxu0 0
        %961 = vmatpush1.bf16.msra.mxu0 0
        %962 = vmatprep.subr.bf16.mxu0 0
        %963 = vmatpush1.bf16.msra.mxu0 0
        %964 = vmatprep.subr.bf16.mxu0 0
        %965 = vmatpush1.bf16.msra.mxu0 0
        %966 = vmatprep.subr.bf16.mxu0 0
        %967 = vmatpush1.bf16.msra.mxu0 0
        %968 = vmatprep.subr.bf16.mxu0 0
        %969 = vmatpush1.bf16.msra.mxu0 0
        %970 = vmatprep.subr.bf16.mxu0 0
        %971 = vmatpush1.bf16.msra.mxu0 0
        %972 = vmatprep.subr.bf16.mxu0 0
        %973 = vmatpush1.bf16.msra.mxu0 0
        %974 = vmatprep.subr.bf16.mxu0 0
        %975 = vmatpush1.bf16.msra.mxu0 0
        %976 = vmatprep.subr.bf16.mxu0 0
        %977 = vmatpush1.bf16.msra.mxu0 0
        %978 = vmatprep.subr.bf16.mxu0 0
        %979 = vmatpush1.bf16.msra.mxu0 0
        %980 = vmatprep.mubr.bf16.mxu0 0
        %981 = vmatmul.mubr.bf16.gmra.mrb[0].mxu0 %v943
        %v982 = vpop.f32.mrb[0].mxu0
        %v983 = vadd.f32 0.0, %v982
        %v984 = vpop.f32.mrb[0].mxu0
        %v985 = vpop.f32.mrb[0].mxu0
        %v986 = vadd.f32 0.0, %v985
        %v987 = vpop.f32.mrb[0].mxu0
        %988 = vmatprep.mubr.bf16.mxu0 0
        %989 = vmatmul.mubr.bf16.gmra.mrb[0].mxu0 %v946
        %v990 = vpop.f32.mrb[0].mxu0
        %v991 = vadd.f32 0.0, %v990
        %v992 = vpop.f32.mrb[0].mxu0
        %v993 = vpop.f32.mrb[0].mxu0
        %v994 = vpop.f32.mrb[0].mxu0
        %995 = vdwg.mxu0
        %v996 = vrot.slane %v983, 1
        %v997 = vrot.slane %v986, 1
        %v998 = vrot.slane %v991, 1
        %v999 = vsel %vm586, %v997, %v998
        %v1000 = vsel %vm586, %v996, %v997
        %1004 = vrot.lane.b32.xlu0 %v983, 96
        %v1005 = vpop.permute.xlu0 %1004
        %1006 = vrot.lane.b32.xlu0 %v986, 96
        %v1007 = vpop.permute.xlu0 %1006
        %1008 = vrot.lane.b32.xlu0 %v991, 96
        %v1009 = vpop.permute.xlu0 %1008
        %v1013 = vrot.slane %v1005, 7
        %v1014 = vrot.slane %v1007, 7
        %v1015 = vrot.slane %v1009, 7
        %v1016 = vsel %vm899, %v1013, %v1014
        %v1017 = vsel %vm899, %v1015, %v1013
        %v1018 = vadd.f32 %v1000, %v1017
        %v1019 = vadd.f32 %v999, %v1016
        %v1020 = vrot.slane %v983, 3
        %v1021 = vrot.slane %v986, 3
        %v1022 = vrot.slane %v991, 3
        %vm1023 = vcmp.lt.s32.totalorder %v513, 5
        %v1024 = vsel %vm1023, %v1021, %v1022
        %v1025 = vsel %vm1023, %v1020, %v1021
        %v1026 = vrot.slane %v1005, 5
        %v1027 = vrot.slane %v1007, 5
        %v1028 = vrot.slane %v1009, 5
        %vm1029 = vcmp.lt.s32.totalorder %v513, 3
        %v1030 = vsel %vm1029, %v1026, %v1027
        %v1031 = vsel %vm1029, %v1028, %v1026
        %v1032 = vadd.f32 %v1025, %v1031
        %v1033 = vadd.f32 %v1024, %v1030
        %v1034 = vrot.slane %v983, 5
        %v1035 = vrot.slane %v986, 5
        %v1036 = vrot.slane %v991, 5
        %v1037 = vsel %vm1029, %v1035, %v1036
        %v1038 = vsel %vm1029, %v1034, %v1035
        %v1039 = vrot.slane %v1005, 3
        %v1040 = vrot.slane %v1007, 3
        %v1041 = vrot.slane %v1009, 3
        %v1042 = vsel %vm1023, %v1039, %v1040
        %v1043 = vsel %vm1023, %v1041, %v1039
        %v1044 = vadd.f32 %v1038, %v1043
        %v1045 = vadd.f32 %v1037, %v1042
        %v1046 = vrot.slane %v983, 7
        %v1047 = vrot.slane %v986, 7
        %v1048 = vrot.slane %v991, 7
        %v1049 = vsel %vm899, %v1047, %v1048
        %v1050 = vsel %vm899, %v1046, %v1047
        %v1051 = vrot.slane %v1005, 1
        %v1052 = vrot.slane %v1007, 1
        %v1053 = vrot.slane %v1009, 1
        %v1054 = vsel %vm586, %v1051, %v1052
        %v1055 = vsel %vm586, %v1053, %v1051
        %v1056 = vadd.f32 %v1050, %v1055
        %v1057 = vadd.f32 %v1049, %v1054
        %v1058 = vlaneseq
        %v1059 = vand.u32 %v1058, 127
        %vm1060 = vcmp.lt.s32.totalorder %v1059, 4
        %vm1061 = vcmp.lt.s32.totalorder %v1059, 8
        %vm1062 = vcmp.lt.s32.totalorder %v1059, 12
        %v1063 = vsel %vm1062, %v1044, %v1056
        %v1064 = vsel %vm1062, %v1045, %v1057
        %v1065 = vsel %vm1061, %v1032, %v1063
        %v1066 = vsel %vm1061, %v1033, %v1064
        %v1067 = vsel %vm1060, %v1018, %v1065
        %v1068 = vsel %vm1060, %v1019, %v1066
        %1071 = vrot.lane.b32.xlu0 %v1067, 16
        %v1072 = vpop.permute.xlu0 %1071
        %1073 = vrot.lane.b32.xlu0 %v1068, 16
        %v1074 = vpop.permute.xlu0 %1073
        %v1077 = vadd.f32 %v983, %v1072
        %v1078 = vadd.f32 %v986, %v1074
        %v1080 = vlaneseq
        %v1081 = vshrl.u32 %v1080, 7
        %v1082 = vsub.s32 0, %v1081
        %v1083 = vrot.slane %v477, %v1082
        %1084 = vrot.lane.b32.xlu0 %v1083, 16
        %v1085 = vpop.permute.xlu0 %1084
        %v1087 = vadd.f32 %v1077, %v1085
        %v1088 = vadd.f32 %v1078, %v1085
        %vm1089 = vcmask 261248
        %v1090 = vsel %vm1089, %v1087, 0.0
        %v1091 = vsel %vm1089, %v1088, 0.0
        %v1092 = vadd.f32 %v1090, %v1091
        %v1093 = vrot.slane %v1092, 4
        %v1094 = vadd.f32 %v1092, %v1093
        %v1095 = vrot.slane %v1094, 2
        %v1096 = vadd.f32 %v1094, %v1095
        %v1097 = vrot.slane %v1096, 1
        %v1098 = vadd.f32 %v1096, %v1097
        %v1099 = vrcp.pop 16.0
        %v1100 = vmul.f32 %v1098, %v1099
        %v1101 = vld [vmem:[%s7] sm:$0xff]
        %v1102 = vld [vmem:[%s7 + $0x8] sm:$0xff]
        %v1103 = vld [vmem:[#allocation7] sm:$0x1]
        %1105 = vrot.lane.b32.xlu0 %v1100, 112
        %v1106 = vpop.permute.xlu0 %1105
        %v1107 = vsel %vm826, %v1106, 0
        %1109 = vmatprep.subr.mxu0 0.0
        %1110 = vmatpush1.msra.mxu0 %v1101
        %1111 = vmatprep.subr.mxu0 0.0
        %1112 = vmatpush1.msra.mxu0 %v1102
        %1113 = vmatprep.subr.mxu0 0.0
        %1114 = vmatpush1.msra.mxu0 0.0
        %1115 = vmatprep.subr.mxu0 0.0
        %1116 = vmatpush1.msra.mxu0 0.0
        %1117 = vmatprep.subr.mxu0 0.0
        %1118 = vmatpush1.msra.mxu0 0.0
        %1119 = vmatprep.subr.mxu0 0.0
        %1120 = vmatpush1.msra.mxu0 0.0
        %1121 = vmatprep.subr.mxu0 0.0
        %1122 = vmatpush1.msra.mxu0 0.0
        %1123 = vmatprep.subr.mxu0 0.0
        %1124 = vmatpush1.msra.mxu0 0.0
        %1125 = vmatprep.subr.mxu0 0.0
        %1126 = vmatpush1.msra.mxu0 0.0
        %1127 = vmatprep.subr.mxu0 0.0
        %1128 = vmatpush1.msra.mxu0 0.0
        %1129 = vmatprep.subr.mxu0 0.0
        %1130 = vmatpush1.msra.mxu0 0.0
        %1131 = vmatprep.subr.mxu0 0.0
        %1132 = vmatpush1.msra.mxu0 0.0
        %1133 = vmatprep.subr.mxu0 0.0
        %1134 = vmatpush1.msra.mxu0 0.0
        %1135 = vmatprep.subr.mxu0 0.0
        %1136 = vmatpush1.msra.mxu0 0.0
        %1137 = vmatprep.subr.mxu0 0.0
        %1138 = vmatpush1.msra.mxu0 0.0
        %1139 = vmatprep.subr.mxu0 0.0
        %1140 = vmatpush1.msra.mxu0 0.0
        %1141 = vmatprep.subr.mxu0 0.0
        %1142 = vmatpush1.msra.mxu0 0.0
        %1143 = vmatprep.subr.mxu0 0.0
        %1144 = vmatpush1.msra.mxu0 0.0
        %1145 = vmatprep.subr.mxu0 0.0
        %1146 = vmatpush1.msra.mxu0 0.0
        %1147 = vmatprep.subr.mxu0 0.0
        %1148 = vmatpush1.msra.mxu0 0.0
        %1149 = vmatprep.subr.mxu0 0.0
        %1150 = vmatpush1.msra.mxu0 0.0
        %1151 = vmatprep.subr.mxu0 0.0
        %1152 = vmatpush1.msra.mxu0 0.0
        %1153 = vmatprep.subr.mxu0 0.0
        %1154 = vmatpush1.msra.mxu0 0.0
        %1155 = vmatprep.subr.mxu0 0.0
        %1156 = vmatpush1.msra.mxu0 0.0
        %1157 = vmatprep.subr.mxu0 0.0
        %1158 = vmatpush1.msra.mxu0 0.0
        %1159 = vmatprep.subr.mxu0 0.0
        %1160 = vmatpush1.msra.mxu0 0.0
        %1161 = vmatprep.subr.mxu0 0.0
        %1162 = vmatpush1.msra.mxu0 0.0
        %1163 = vmatprep.subr.mxu0 0.0
        %1164 = vmatpush1.msra.mxu0 0.0
        %1165 = vmatprep.subr.mxu0 0.0
        %1166 = vmatpush1.msra.mxu0 0.0
        %1167 = vmatprep.subr.mxu0 0.0
        %1168 = vmatpush1.msra.mxu0 0.0
        %1169 = vmatprep.subr.mxu0 0.0
        %1170 = vmatpush1.msra.mxu0 0.0
        %1171 = vmatprep.subr.mxu0 0.0
        %1172 = vmatpush1.msra.mxu0 0.0
        %1173 = vmatprep.mubr.f32.mxu0 0.0
        %1174 = vmatmul.mubr.f32.gmra.mrb[0].mxu0 %v1107
        %v1175 = vpop.f32.mrb[0].mxu0
        %v1176 = vadd.f32 %v1103, %v1175
        %v1177 = vpop.f32.mrb[0].mxu0
        %1178 = vdwg.mxu0
        %v1179 = vmax.f32 %v1176, 0.0
        %v1180 = vld [vmem:[%s9] sm:$0xf]
        %v1181 = vld [vmem:[%s10] sm:$0x1]
        %vm1182 = vcmask 31744
        %v1184 = vsel %vm1182, %v1179, 0
        %v1187 = vsel %vm520, %v1180, 0
        %1189 = vmatprep.subr.mxu0 0.0
        %1190 = vmatpush1.msra.mxu0 %v1187
        %1191 = vmatprep.subr.mxu0 0.0
        %1192 = vmatpush1.msra.mxu0 0.0
        %1193 = vmatprep.subr.mxu0 0.0
        %1194 = vmatpush1.msra.mxu0 0.0
        %1195 = vmatprep.subr.mxu0 0.0
        %1196 = vmatpush1.msra.mxu0 0.0
        %1197 = vmatprep.subr.mxu0 0.0
        %1198 = vmatpush1.msra.mxu0 0.0
        %1199 = vmatprep.subr.mxu0 0.0
        %1200 = vmatpush1.msra.mxu0 0.0
        %1201 = vmatprep.subr.mxu0 0.0
        %1202 = vmatpush1.msra.mxu0 0.0
        %1203 = vmatprep.subr.mxu0 0.0
        %1204 = vmatpush1.msra.mxu0 0.0
        %1205 = vmatprep.subr.mxu0 0.0
        %1206 = vmatpush1.msra.mxu0 0.0
        %1207 = vmatprep.subr.mxu0 0.0
        %1208 = vmatpush1.msra.mxu0 0.0
        %1209 = vmatprep.subr.mxu0 0.0
        %1210 = vmatpush1.msra.mxu0 0.0
        %1211 = vmatprep.subr.mxu0 0.0
        %1212 = vmatpush1.msra.mxu0 0.0
        %1213 = vmatprep.subr.mxu0 0.0
        %1214 = vmatpush1.msra.mxu0 0.0
        %1215 = vmatprep.subr.mxu0 0.0
        %1216 = vmatpush1.msra.mxu0 0.0
        %1217 = vmatprep.subr.mxu0 0.0
        %1218 = vmatpush1.msra.mxu0 0.0
        %1219 = vmatprep.subr.mxu0 0.0
        %1220 = vmatpush1.msra.mxu0 0.0
        %1221 = vmatprep.subr.mxu0 0.0
        %1222 = vmatpush1.msra.mxu0 0.0
        %1223 = vmatprep.subr.mxu0 0.0
        %1224 = vmatpush1.msra.mxu0 0.0
        %1225 = vmatprep.subr.mxu0 0.0
        %1226 = vmatpush1.msra.mxu0 0.0
        %1227 = vmatprep.subr.mxu0 0.0
        %1228 = vmatpush1.msra.mxu0 0.0
        %1229 = vmatprep.subr.mxu0 0.0
        %1230 = vmatpush1.msra.mxu0 0.0
        %1231 = vmatprep.subr.mxu0 0.0
        %1232 = vmatpush1.msra.mxu0 0.0
        %1233 = vmatprep.subr.mxu0 0.0
        %1234 = vmatpush1.msra.mxu0 0.0
        %1235 = vmatprep.subr.mxu0 0.0
        %1236 = vmatpush1.msra.mxu0 0.0
        %1237 = vmatprep.subr.mxu0 0.0
        %1238 = vmatpush1.msra.mxu0 0.0
        %1239 = vmatprep.subr.mxu0 0.0
        %1240 = vmatpush1.msra.mxu0 0.0
        %1241 = vmatprep.subr.mxu0 0.0
        %1242 = vmatpush1.msra.mxu0 0.0
        %1243 = vmatprep.subr.mxu0 0.0
        %1244 = vmatpush1.msra.mxu0 0.0
        %1245 = vmatprep.subr.mxu0 0.0
        %1246 = vmatpush1.msra.mxu0 0.0
        %1247 = vmatprep.subr.mxu0 0.0
        %1248 = vmatpush1.msra.mxu0 0.0
        %1249 = vmatprep.subr.mxu0 0.0
        %1250 = vmatpush1.msra.mxu0 0.0
        %1251 = vmatprep.subr.mxu0 0.0
        %1252 = vmatpush1.msra.mxu0 0.0
        %1253 = vmatprep.mubr.f32.mxu0 0.0
        %1254 = vmatmul.mubr.f32.gmra.mrb[0].mxu0 %v1184
        %v1255 = vpop.f32.mrb[0].mxu0
        %v1256 = vadd.f32 %v1181, %v1255
        %v1257 = vpop.f32.mrb[0].mxu0
        %1258 = vdwg.mxu0
        %v1259 = vxor.u32 %v1256, 2147483648
        %v1260 = vmul.f32 %v1259, 1.442695
        %v1261 = vpow.pop %v1260
        %v1262 = vadd.f32 %v1261, 1.0
        %v1263 = vrcp.pop %v1262
        %v1264 = vmul.f32 1.0, %v1263
        %v1265 = vlaneseq
        %v1266 = vshrl.u32 %v1265, 7
        %v1267 = vsub.s32 0, %v1266
        %v1268 = vrot.slane %v1264, %v1267
        %1271 = vrot.lane.b32.xlu0 %v1087, 112
        %v1272 = vpop.permute.xlu0 %1271
        %1273 = vrot.lane.b32.xlu0 %v1088, 112
        %v1274 = vpop.permute.xlu0 %1273
        %v1277 = vmul.f32 %v1268, %v1272
        %v1278 = vmul.f32 %v1268, %v1274
        %1279 = vrot.lane.b32.xlu0 %v794, 112
        %v1280 = vpop.permute.xlu0 %1279
        %1281 = vrot.lane.b32.xlu0 %v811, 112
        %v1282 = vpop.permute.xlu0 %1281
        %v1285 = vadd.f32 %v1277, %v1280
        %v1286 = vadd.f32 %v1278, %v1282
        %v1287 = vmax.f32 %v1285, 0.0
        %v1288 = vmax.f32 %v1286, 0.0
        %v1289 = vpack.c.bf16 %v1288, %v1287
        %v1290 = vld [vmem:[%s11] sm:$0xf]
        %v1291 = vld [vmem:[%s11 + $0x4] sm:$0xf]
        %v1292 = vld [vmem:[%s12] sm:$0x1]
        %v1294 = vlaneseq
        %v1295 = vshrl.u32 %v1294, 7
        %v1296 = vsub.s32 0, %v1295
        %v1297 = vrot.slane %v1292, %v1296
        %v1301 = vunpack.c.l.b16 %v1290
        %v1302 = vunpack.c.l.b16 %v1291
        %v1303 = vpack.c.b16 %v1302, %v1301
        %v1306 = vsel %vm826, %v1289, 0
        %1308 = vmatprep.subr.bf16.mxu0 0
        %1309 = vmatpush1.bf16.msra.mxu0 %v1303
        %1310 = vmatprep.subr.bf16.mxu0 0
        %1311 = vmatpush1.bf16.msra.mxu0 0
        %1312 = vmatprep.subr.bf16.mxu0 0
        %1313 = vmatpush1.bf16.msra.mxu0 0
        %1314 = vmatprep.subr.bf16.mxu0 0
        %1315 = vmatpush1.bf16.msra.mxu0 0
        %1316 = vmatprep.subr.bf16.mxu0 0
        %1317 = vmatpush1.bf16.msra.mxu0 0
        %1318 = vmatprep.subr.bf16.mxu0 0
        %1319 = vmatpush1.bf16.msra.mxu0 0
        %1320 = vmatprep.subr.bf16.mxu0 0
        %1321 = vmatpush1.bf16.msra.mxu0 0
        %1322 = vmatprep.subr.bf16.mxu0 0
        %1323 = vmatpush1.bf16.msra.mxu0 0
        %1324 = vmatprep.subr.bf16.mxu0 0
        %1325 = vmatpush1.bf16.msra.mxu0 0
        %1326 = vmatprep.subr.bf16.mxu0 0
        %1327 = vmatpush1.bf16.msra.mxu0 0
        %1328 = vmatprep.subr.bf16.mxu0 0
        %1329 = vmatpush1.bf16.msra.mxu0 0
        %1330 = vmatprep.subr.bf16.mxu0 0
        %1331 = vmatpush1.bf16.msra.mxu0 0
        %1332 = vmatprep.subr.bf16.mxu0 0
        %1333 = vmatpush1.bf16.msra.mxu0 0
        %1334 = vmatprep.subr.bf16.mxu0 0
        %1335 = vmatpush1.bf16.msra.mxu0 0
        %1336 = vmatprep.subr.bf16.mxu0 0
        %1337 = vmatpush1.bf16.msra.mxu0 0
        %1338 = vmatprep.subr.bf16.mxu0 0
        %1339 = vmatpush1.bf16.msra.mxu0 0
        %1340 = vmatprep.mubr.bf16.mxu0 0
        %1341 = vmatmul.mubr.bf16.gmra.mrb[0].mxu0 %v1306
        %v1342 = vpop.f32.mrb[0].mxu0
        %v1343 = vadd.f32 %v1297, %v1342
        %v1344 = vpop.f32.mrb[0].mxu0
        %v1345 = vpop.f32.mrb[0].mxu0
        %v1346 = vadd.f32 %v1297, %v1345
        %v1347 = vpop.f32.mrb[0].mxu0
        %1348 = vdwg.mxu0
        %1349 = vxpose.xlu0.b32.start [1/16] %v1343, 128
        %1350 = vxpose.xlu0.b32.cont [2/16] %v1346, 128
        %1351 = vxpose.xlu0.b32.cont [3/16] 0.0, 128
        %1352 = vxpose.xlu0.b32.cont [4/16] 0.0, 128
        %1353 = vxpose.xlu0.b32.cont [5/16] 0.0, 128
        %1354 = vxpose.xlu0.b32.cont [6/16] 0.0, 128
        %1355 = vxpose.xlu0.b32.cont [7/16] 0.0, 128
        %1356 = vxpose.xlu0.b32.cont [8/16] 0.0, 128
        %1357 = vxpose.xlu0.b32.cont [9/16] 0.0, 128
        %1358 = vxpose.xlu0.b32.cont [10/16] 0.0, 128
        %1359 = vxpose.xlu0.b32.cont [11/16] 0.0, 128
        %1360 = vxpose.xlu0.b32.cont [12/16] 0.0, 128
        %1361 = vxpose.xlu0.b32.cont [13/16] 0.0, 128
        %1362 = vxpose.xlu0.b32.cont [14/16] 0.0, 128
        %1363 = vxpose.xlu0.b32.cont [15/16] 0.0, 128
        %1364 = vxpose.xlu0.b32.end [16/16] 0.0, 128
        %v1365 = vpop.trf.xlu0
        %v1366 = vpop.trf.xlu0
        %v1367 = vpop.trf.xlu0
        %v1368 = vpop.trf.xlu0
        %v1369 = vpop.trf.xlu0
        %v1370 = vpop.trf.xlu0
        %v1371 = vpop.trf.xlu0
        %v1372 = vpop.trf.xlu0
        %v1373 = vpop.trf.xlu0
        %v1374 = vpop.trf.xlu0
        %v1375 = vpop.trf.xlu0
        %v1376 = vpop.trf.xlu0
        %v1377 = vpop.trf.xlu0
        %v1378 = vpop.trf.xlu0
        %v1379 = vpop.trf.xlu0
        %v1380 = vpop.trf.xlu0
        %1381 = vst.msk [vmem:[%s469] sm:$0xff] %vm826, %v1365
        %1382 = vst.msk [vmem:[%s469 + $0x8] sm:$0xff] %vm826, %v1366
        %s1383 = sand.u32 %s315, 1
        %s1384 = scalar_lea.sflag [#allocation4], %s1383
        %s1385 = sand.u32 %s315, 1
        %s1386 = smul.addr %s1385, 16
        %s1387 = scalar_lea.vmem [#allocation8], %s1386
        // Predicated region
        $region85: #{tpu_custom_call.1} parent=71 // pred_check
          %p1388 = pneg %p325
        $region86: #{tpu_custom_call.1} parent=71 // pred_check_branch
          %1390 = sbr.rel (%p1388) target = $region88
        $region87: #{tpu_custom_call.1} parent=71 // pred_region
          %s1392 = ssub.s32 256, 256
          %1393 = vsyncadd %s1384, %s1392
          %s1394 = smul.addr %s29, 2
          %s1395 = smul.addr %s1394, 128
          %s1396 = scalar_lea.hbm %s13, %s1395
          %s1397 = sshll.u32 %s1387, 4
          %s1398 = int_to_ptr.vmem [resolvable:$true] %s1397
          %1403 = dma.vmem_to_hbm [thread:$0]  %s1398, 256, %s1396, %s1384, 128, 128, 8
        $region88: #{tpu_custom_call.1} parent=71 // pred_fallthru
          _
      $region72: #{tpu_custom_call.1} parent=5 // pred_fallthru
        _
      %p1404 = scmp.le.s32.totalorder 2, %s24
      // Predicated region
      $region89: #{tpu_custom_call.1} parent=5 // pred_check
        %p1405 = pneg %p1404
      $region90: #{tpu_custom_call.1} parent=5 // pred_check_branch
        %1407 = sbr.rel (%p1405) target = $region92
      $region91: #{tpu_custom_call.1} parent=5 // pred_region
        %s1408 = ssub.s32 %s24, 2
        // Predicated region
        $region93: #{tpu_custom_call.1} parent=91 // pred_check
          %p1409 = pneg %p331
        $region94: #{tpu_custom_call.1} parent=91 // pred_check_branch
          %1411 = sbr.rel (%p1409) target = $region96
        $region95: #{tpu_custom_call.1} parent=91 // pred_region
          %s1412 = sand.u32 %s316, 1
          %s1413 = scalar_lea.sflag [#allocation4], %s1412
          %s1414 = sand.u32 %s316, 1
          %s1415 = smul.addr %s1414, 16
          %s1416 = scalar_lea.vmem [#allocation8], %s1415
          %1417 = dma.done %s1413, 256
        $region96: #{tpu_custom_call.1} parent=91 // pred_fallthru
          _
      $region92: #{tpu_custom_call.1} parent=5 // pred_fallthru
        _
    $region6: #{tpu_custom_call.1} parent=1 // loop_footer
      %s28 = sadd.s32 1, %s24
    $region7: #{tpu_custom_call.1} parent=1 // loop_footer_branch
      %23 = sbr.rel target = $region3
    $region8: #{tpu_custom_call.1} parent=1 // loop_exit
      _
    %1418 = vsyncpa [#allocation3], 1
    %s1419 = scalar_lea.sflag [#allocation3], 1
    %1420 = vsyncpa %s1419, 1
    %1421 = vsyncpa [#allocation6], 1
    %1422 = vsyncpa [#allocation4], 1
    %s1423 = scalar_lea.sflag [#allocation4], 1
    %1424 = vsyncpa %s1423, 1

</llo_original>
